<compile_context>
chip_gen: v5e
topology: v5e:2x2
jax: 0.10.0
libtpu: 0.0.40
codegen_flags: <defaults>
</compile_context>

<pallas_src>
import jax
import jax.numpy as jnp
from jax.experimental import pallas as pl
from jax.experimental.pallas import tpu as pltpu

EPS = 1e-5
VMEM_LIMIT = 32 * 1024 * 1024   # safe on v5e/v6e/v7x; above v5e's 16 MiB scoped default


def _round_up(x, k):
    return (x + k - 1) // k * k


# ------------------------------ kernels ------------------------------

def _conv_stats_kernel(x_ref, w_ref, y_ref, sum_ref, sq_ref, acc_s, acc_q):
    # x_ref: (TILE_M, 9*Cin) bf16   w_ref: (9*Cin, Cout') bf16   y_ref: (TILE_M, Cout') f32
    # acc_s/acc_q: (1, Cout') f32 VMEM scratch, accumulated across the ("arbitrary") M grid axis.
    i = pl.program_id(0)

    @pl.when(i == 0)
    def _():
        acc_s[...] = jnp.zeros_like(acc_s)
        acc_q[...] = jnp.zeros_like(acc_q)

    y = jnp.dot(x_ref[...], w_ref[...], preferred_element_type=jnp.float32)  # single MXU matmul
    y_ref[...] = y
    acc_s[...] += jnp.sum(y, axis=0, keepdims=True)
    acc_q[...] += jnp.sum(y * y, axis=0, keepdims=True)

    @pl.when(i == pl.num_programs(0) - 1)
    def _():
        sum_ref[...] = acc_s[...]
        sq_ref[...] = acc_q[...]


def _bn_relu_split_kernel(y_ref, scale_ref, shift_ref, h_ref, sc_ref):
    # y_ref: (TILE_M, 2*Cout) fused [conv1 | conv3] output.  h = relu(bn1), sc = bn3.
    cout = h_ref.shape[-1]
    z1 = y_ref[:, :cout] * scale_ref[:, :cout] + shift_ref[:, :cout]
    z3 = y_ref[:, cout:] * scale_ref[:, cout:] + shift_ref[:, cout:]
    h_ref[...] = jnp.maximum(z1, 0.0)
    sc_ref[...] = z3


def _bn_relu_kernel(y_ref, scale_ref, shift_ref, h_ref):
    h_ref[...] = jnp.maximum(y_ref[...] * scale_ref[...] + shift_ref[...], 0.0)


def _bn_add_relu_kernel(y_ref, scale_ref, shift_ref, sc_ref, out_ref):
    z = y_ref[...] * scale_ref[...] + shift_ref[...]
    out_ref[...] = jnp.maximum(sc_ref[...] + z, 0.0)


# ------------------------------ pallas_call wrappers ------------------------------

def _conv_pass(xcols, wmat, tile_m):
    # xcols: (M_pad, K) bf16, wmat: (K, Cout') bf16 -> y (M_pad, Cout') f32, sum/sq (1, Cout') f32
    m_pad, k = xcols.shape
    cout = wmat.shape[1]
    nt = m_pad // tile_m
    return pl.pallas_call(
        _conv_stats_kernel,
        grid=(nt,),
        in_specs=[pl.BlockSpec((tile_m, k), lambda i: (i, 0)),
                  pl.BlockSpec((k, cout), lambda i: (0, 0))],
        out_specs=(pl.BlockSpec((tile_m, cout), lambda i: (i, 0)),
                   pl.BlockSpec((1, cout), lambda i: (0, 0)),
                   pl.BlockSpec((1, cout), lambda i: (0, 0))),
        out_shape=(jax.ShapeDtypeStruct((m_pad, cout), jnp.float32),
                   jax.ShapeDtypeStruct((1, cout), jnp.float32),
                   jax.ShapeDtypeStruct((1, cout), jnp.float32)),
        scratch_shapes=[pltpu.VMEM((1, cout), jnp.float32),
                        pltpu.VMEM((1, cout), jnp.float32)],
        compiler_params=pltpu.CompilerParams(
            dimension_semantics=("arbitrary",),      # BN stats accumulate across M tiles
            vmem_limit_bytes=VMEM_LIMIT),
        cost_estimate=pl.CostEstimate(
            flops=2 * m_pad * k * cout,
            transcendentals=0,
            bytes_accessed=2 * m_pad * k + 2 * k * cout + 4 * m_pad * cout),
    )(xcols, wmat)


def _bn_finalize_split(y, scale, shift, tile_m, cout):
    m_pad, c2 = y.shape
    nt = m_pad // tile_m
    return pl.pallas_call(
        _bn_relu_split_kernel,
        grid=(nt,),
        in_specs=[pl.BlockSpec((tile_m, c2), lambda i: (i, 0)),
                  pl.BlockSpec((1, c2), lambda i: (0, 0)),
                  pl.BlockSpec((1, c2), lambda i: (0, 0))],
        out_specs=(pl.BlockSpec((tile_m, cout), lambda i: (i, 0)),
                   pl.BlockSpec((tile_m, cout), lambda i: (i, 0))),
        out_shape=(jax.ShapeDtypeStruct((m_pad, cout), jnp.float32),
                   jax.ShapeDtypeStruct((m_pad, cout), jnp.float32)),
        compiler_params=pltpu.CompilerParams(
            dimension_semantics=("parallel",), vmem_limit_bytes=VMEM_LIMIT),
    )(y, scale, shift)


def _bn_finalize(y, scale, shift, tile_m):
    m_pad, c = y.shape
    nt = m_pad // tile_m
    return pl.pallas_call(
        _bn_relu_kernel,
        grid=(nt,),
        in_specs=[pl.BlockSpec((tile_m, c), lambda i: (i, 0)),
                  pl.BlockSpec((1, c), lambda i: (0, 0)),
                  pl.BlockSpec((1, c), lambda i: (0, 0))],
        out_specs=pl.BlockSpec((tile_m, c), lambda i: (i, 0)),
        out_shape=jax.ShapeDtypeStruct((m_pad, c), jnp.float32),
        compiler_params=pltpu.CompilerParams(
            dimension_semantics=("parallel",), vmem_limit_bytes=VMEM_LIMIT),
    )(y, scale, shift)


def _bn_add_relu(y, scale, shift, sc, tile_m):
    m_pad, c = y.shape
    nt = m_pad // tile_m
    return pl.pallas_call(
        _bn_add_relu_kernel,
        grid=(nt,),
        in_specs=[pl.BlockSpec((tile_m, c), lambda i: (i, 0)),
                  pl.BlockSpec((1, c), lambda i: (0, 0)),
                  pl.BlockSpec((1, c), lambda i: (0, 0)),
                  pl.BlockSpec((tile_m, c), lambda i: (i, 0))],
        out_specs=pl.BlockSpec((tile_m, c), lambda i: (i, 0)),
        out_shape=jax.ShapeDtypeStruct((m_pad, c), jnp.float32),
        compiler_params=pltpu.CompilerParams(
            dimension_semantics=("parallel",), vmem_limit_bytes=VMEM_LIMIT),
    )(y, scale, shift, sc)


# ------------------------------ glue (plain JAX) ------------------------------

def _im2col(x_nhwc, ksize, stride, oh, ow, m_pad, dtype=jnp.bfloat16):
    # -> (M_pad, ksize*ksize*C) patches; column order is (kh, kw) major, channel minor.
    pad = ksize // 2
    xp = jnp.pad(x_nhwc, ((0, 0), (pad, pad), (pad, pad), (0, 0)))
    c = x_nhwc.shape[-1]
    cols = []
    for kh in range(ksize):
        for kw in range(ksize):
            p = xp[:, kh:kh + stride * (oh - 1) + 1:stride,
                      kw:kw + stride * (ow - 1) + 1:stride, :]
            cols.append(p.reshape(-1, c))
    x2 = jnp.concatenate(cols, axis=1).astype(dtype)
    m = x2.shape[0]
    if m_pad > m:
        x2 = jnp.pad(x2, ((0, m_pad - m), (0, 0)))   # zero rows: no effect on BN sums
    return x2


def _w_to_mat(w_oihw, dtype=jnp.bfloat16):
    cout, cin, kh, kw = w_oihw.shape
    return jnp.transpose(w_oihw, (2, 3, 1, 0)).reshape(kh * kw * cin, cout).astype(dtype)


def _bn_scale_shift(s, q, m, gamma, beta):
    # Biased batch stats, matching nn.BatchNorm2d training mode.  Conv bias omitted upstream
    # because it cancels against the mean subtraction.
    mean = s / m
    var = q / m - mean * mean
    scale = gamma * jax.lax.rsqrt(var + EPS)
    shift = beta - mean * scale
    return scale.astype(jnp.float32), shift.astype(jnp.float32)


def res_block_forward(x_nchw, params, ksize=3, stride=2, tile_m=512):
    n, cin, h, w = x_nchw.shape
    cout = params["w1"].shape[0]
    pad = ksize // 2
    oh = (h + 2 * pad - ksize) // stride + 1
    ow = (w + 2 * pad - ksize) // stride + 1
    m = n * oh * ow

    tile = _round_up(min(tile_m, _round_up(m, 8)), 8)
    m_pad = _round_up(m, tile)

    x_nhwc = jnp.transpose(x_nchw, (0, 2, 3, 1)).astype(jnp.float32)
    diff = (stride != 1) or (cin != cout)
    row = lambda v: v.reshape(1, -1).astype(jnp.float32)

    # ---- stage 1: conv1 (+ conv3 shortcut fused into one RHS) + BN stats ----
    xs1 = _im2col(x_nhwc, ksize, stride, oh, ow, m_pad)          # (M_pad, 9*Cin) bf16
    w1m = _w_to_mat(params["w1"])
    if diff:
        w3m = _w_to_mat(params["w3"])
        wA = jnp.concatenate([w1m, w3m], axis=1)                 # (9*Cin, 2*Cout)
        gA = jnp.concatenate([row(params["g1"]), row(params["g3"])], axis=1)
        bA = jnp.concatenate([row(params["be1"]), row(params["be3"])], axis=1)
    else:
        wA, gA, bA = w1m, row(params["g1"]), row(params["be1"])

    yA, sA, qA = _conv_pass(xs1, wA, tile)
    scaleA, shiftA = _bn_scale_shift(sA, qA, m, gA, bA)

    if diff:
        h1_flat, sc_flat = _bn_finalize_split(yA, scaleA, shiftA, tile, cout)
    else:
        h1_flat = _bn_finalize(yA, scaleA, shiftA, tile)
        sc_flat = jnp.pad(x_nhwc.reshape(m, cout), ((0, m_pad - m), (0, 0)))

    # ---- stage 2: conv2 + BN stats, then normalize + residual add + relu ----
    h1_nhwc = h1_flat[:m].reshape(n, oh, ow, cout)
    xs2 = _im2col(h1_nhwc, ksize, 1, oh, ow, m_pad)              # (M_pad, 9*Cout) bf16
    w2m = _w_to_mat(params["w2"])
    y2, s2, q2 = _conv_pass(xs2, w2m, tile)
    scale2, shift2 = _bn_scale_shift(s2, q2, m, row(params["g2"]), row(params["be2"]))

    out_flat = _bn_add_relu(y2, scale2, shift2, sc_flat, tile)
    out_nhwc = out_flat[:m].reshape(n, oh, ow, cout)
    return jnp.transpose(out_nhwc, (0, 3, 1, 2))                 # back to NCHW


# ------------------------------ pure-JAX reference ------------------------------

def reference(x, p):
    def conv(x, w, b, stride):
        y = jax.lax.conv_general_dilated(
            x, w, (stride, stride), ((1, 1), (1, 1)),
            dimension_numbers=("NCHW", "OIHW", "NCHW"),
            precision=jax.lax.Precision.HIGHEST)
        return y + b[None, :, None, None]

    def bn(x, g, be):
        mean = jnp.mean(x, axis=(0, 2, 3), keepdims=True)
        var = jnp.mean((x - mean) ** 2, axis=(0, 2, 3), keepdims=True)
        return (x - mean) * jax.lax.rsqrt(var + EPS) * g[None, :, None, None] + be[None, :, None, None]

    h = jax.nn.relu(bn(conv(x, p["w1"], p["b1"], 2), p["g1"], p["be1"]))
    out = bn(conv(h, p["w2"], p["b2"], 1), p["g2"], p["be2"])
    sc = bn(conv(x, p["w3"], p["b3"], 2), p["g3"], p["be3"])
    return jax.nn.relu(sc + out)


if __name__ == "__main__":
    N, CIN, COUT, H, W = 2, 4, 8, 16, 16
    key = jax.random.PRNGKey(0)
    ks = jax.random.split(key, 12)

    x = jax.random.normal(ks[0], (N, CIN, H, W), jnp.float32)
    params = {
        "w1": 0.2 * jax.random.normal(ks[1], (COUT, CIN, 3, 3), jnp.float32),
        "b1": 0.1 * jax.random.normal(ks[2], (COUT,), jnp.float32),
        "g1": 1.0 + 0.1 * jax.random.normal(ks[3], (COUT,), jnp.float32),
        "be1": 0.1 * jax.random.normal(ks[3], (COUT,), jnp.float32),
        "w2": 0.2 * jax.random.normal(ks[4], (COUT, COUT, 3, 3), jnp.float32),
        "b2": 0.1 * jax.random.normal(ks[5], (COUT,), jnp.float32),
        "g2": 1.0 + 0.1 * jax.random.normal(ks[6], (COUT,), jnp.float32),
        "be2": 0.1 * jax.random.normal(ks[6], (COUT,), jnp.float32),
        "w3": 0.2 * jax.random.normal(ks[7], (COUT, CIN, 3, 3), jnp.float32),
        "b3": 0.1 * jax.random.normal(ks[8], (COUT,), jnp.float32),
        "g3": 1.0 + 0.1 * jax.random.normal(ks[9], (COUT,), jnp.float32),
        "be3": 0.1 * jax.random.normal(ks[9], (COUT,), jnp.float32),
    }

    fwd = jax.jit(res_block_forward, static_argnames=("ksize", "stride", "tile_m"))
    # tile_m=64 -> M=128 splits into a 2-step grid, exercising the tiled pipeline + cross-tile
    # BN stats accumulation even at toy size.
    out = jax.block_until_ready(fwd(x, params, tile_m=64))
    ref = jax.block_until_ready(reference(x, params))

    assert out.shape == (N, COUT, H // 2, W // 2), out.shape
    err = float(jnp.max(jnp.abs(out - ref)))
    # bf16-MXU compute vs f32 HIGHEST reference -> allow bf16-level tolerance.
    if err < 5e-2:
        print("KERNEL_OK")
    else:
        print(f"MISMATCH max_abs_err={err}")
</pallas_src>

<mosaic_0001>
module attributes {stable_mosaic.version = 11 : i64} {
  func.func @_conv_stats_kernel(%arg0: i32, %arg1: memref<64x36xbf16, #tpu.memory_space<vmem>>, %arg2: memref<36x16xbf16, #tpu.memory_space<vmem>>, %arg3: memref<64x16xf32, #tpu.memory_space<vmem>>, %arg4: memref<1x16xf32, #tpu.memory_space<vmem>>, %arg5: memref<1x16xf32, #tpu.memory_space<vmem>>, %arg6: memref<1x16xf32, #tpu.memory_space<vmem>>, %arg7: memref<1x16xf32, #tpu.memory_space<vmem>>) attributes {dimension_semantics = [#tpu.dimension_semantics<arbitrary>], iteration_bounds = array<i64: 2>, scalar_prefetch = 0 : i64, scratch_operands = 2 : i64, tpu.core_type = #tpu.core_type<tc>, window_params = [{transform_indices = @transform_0, window_bounds = array<i64: 64, 36>}, {pipeline_mode = #tpu.pipeline_mode<synchronous>, transform_indices = @transform_1, window_bounds = array<i64: 36, 16>}, {transform_indices = @transform_2, window_bounds = array<i64: 64, 16>}, {pipeline_mode = #tpu.pipeline_mode<synchronous>, transform_indices = @transform_3, window_bounds = array<i64: 1, 16>}, {pipeline_mode = #tpu.pipeline_mode<synchronous>, transform_indices = @transform_4, window_bounds = array<i64: 1, 16>}]} {
    %c0_i32 = arith.constant 0 : i32
    %0 = arith.cmpi eq, %arg0, %c0_i32 : i32
    %1 = arith.extui %0 : i1 to i32
    %c0_i32_0 = arith.constant 0 : i32
    %2 = arith.cmpi ne, %1, %c0_i32_0 : i32
    scf.if %2 {
      %cst_17 = arith.constant 0.000000e+00 : f32
      %21 = vector.broadcast %cst_17 : f32 to vector<1x16xf32>
      %c0_18 = arith.constant 0 : index
      %c0_19 = arith.constant 0 : index
      %22 = vector.load %arg6[%c0_18, %c0_19] : memref<1x16xf32, #tpu.memory_space<vmem>>, vector<1x16xf32>
      tpu.vector_store %arg6[%c0_18, %c0_19], %21 {strides = array<i32>} : memref<1x16xf32, #tpu.memory_space<vmem>>, vector<1x16xf32>,
      %cst_20 = arith.constant 0.000000e+00 : f32
      %23 = vector.broadcast %cst_20 : f32 to vector<1x16xf32>
      %c0_21 = arith.constant 0 : index
      %c0_22 = arith.constant 0 : index
      %24 = vector.load %arg7[%c0_21, %c0_22] : memref<1x16xf32, #tpu.memory_space<vmem>>, vector<1x16xf32>
      tpu.vector_store %arg7[%c0_21, %c0_22], %23 {strides = array<i32>} : memref<1x16xf32, #tpu.memory_space<vmem>>, vector<1x16xf32>,
    } else {
    }
    %c0 = arith.constant 0 : index
    %c0_1 = arith.constant 0 : index
    %3 = vector.load %arg1[%c0, %c0_1] : memref<64x36xbf16, #tpu.memory_space<vmem>>, vector<64x36xbf16>
    %c0_2 = arith.constant 0 : index
    %c0_3 = arith.constant 0 : index
    %4 = vector.load %arg2[%c0_2, %c0_3] : memref<36x16xbf16, #tpu.memory_space<vmem>>, vector<36x16xbf16>
    %cst = arith.constant dense<0.000000e+00> : vector<64x16xf32>
    %5 = tpu.matmul %3, %4, %cst {dimension_numbers = #tpu.dot_dimension_numbers<[1], [0], [0], [1], [0, 0, 1, 1], [], []>} : vector<64x36xbf16>, vector<36x16xbf16>, vector<64x16xf32> -> vector<64x16xf32>
    %c0_4 = arith.constant 0 : index
    %c0_5 = arith.constant 0 : index
    %6 = vector.load %arg3[%c0_4, %c0_5] : memref<64x16xf32, #tpu.memory_space<vmem>>, vector<64x16xf32>
    tpu.vector_store %arg3[%c0_4, %c0_5], %5 {strides = array<i32>} : memref<64x16xf32, #tpu.memory_space<vmem>>, vector<64x16xf32>,
    %c0_6 = arith.constant 0 : index
    %c0_7 = arith.constant 0 : index
    %7 = vector.load %arg6[%c0_6, %c0_7] : memref<1x16xf32, #tpu.memory_space<vmem>>, vector<1x16xf32>
    %cst_8 = arith.constant dense<0.000000e+00> : vector<16xf32>
    %8 = vector.multi_reduction <add>, %5, %cst_8 [0] : vector<64x16xf32> to vector<16xf32>
    %9 = vector.shape_cast %8 : vector<16xf32> to vector<1x16xf32>
    %10 = arith.addf %7, %9 : vector<1x16xf32>
    %c0_9 = arith.constant 0 : index
    %c0_10 = arith.constant 0 : index
    %11 = vector.load %arg6[%c0_9, %c0_10] : memref<1x16xf32, #tpu.memory_space<vmem>>, vector<1x16xf32>
    tpu.vector_store %arg6[%c0_9, %c0_10], %10 {strides = array<i32>} : memref<1x16xf32, #tpu.memory_space<vmem>>, vector<1x16xf32>,
    %c0_11 = arith.constant 0 : index
    %c0_12 = arith.constant 0 : index
    %12 = vector.load %arg7[%c0_11, %c0_12] : memref<1x16xf32, #tpu.memory_space<vmem>>, vector<1x16xf32>
    %13 = arith.mulf %5, %5 : vector<64x16xf32>
    %cst_13 = arith.constant dense<0.000000e+00> : vector<16xf32>
    %14 = vector.multi_reduction <add>, %13, %cst_13 [0] : vector<64x16xf32> to vector<16xf32>
    %15 = vector.shape_cast %14 : vector<16xf32> to vector<1x16xf32>
    %16 = arith.addf %12, %15 : vector<1x16xf32>
    %c0_14 = arith.constant 0 : index
    %c0_15 = arith.constant 0 : index
    %17 = vector.load %arg7[%c0_14, %c0_15] : memref<1x16xf32, #tpu.memory_space<vmem>>, vector<1x16xf32>
    tpu.vector_store %arg7[%c0_14, %c0_15], %16 {strides = array<i32>} : memref<1x16xf32, #tpu.memory_space<vmem>>, vector<1x16xf32>,
    %c1_i32 = arith.constant 1 : i32
    %18 = arith.cmpi eq, %arg0, %c1_i32 : i32
    %19 = arith.extui %18 : i1 to i32
    %c0_i32_16 = arith.constant 0 : i32
    %20 = arith.cmpi ne, %19, %c0_i32_16 : i32
    scf.if %20 {
      %c0_17 = arith.constant 0 : index
      %c0_18 = arith.constant 0 : index
      %21 = vector.load %arg6[%c0_17, %c0_18] : memref<1x16xf32, #tpu.memory_space<vmem>>, vector<1x16xf32>
      %c0_19 = arith.constant 0 : index
      %c0_20 = arith.constant 0 : index
      %22 = vector.load %arg4[%c0_19, %c0_20] : memref<1x16xf32, #tpu.memory_space<vmem>>, vector<1x16xf32>
      tpu.vector_store %arg4[%c0_19, %c0_20], %21 {strides = array<i32>} : memref<1x16xf32, #tpu.memory_space<vmem>>, vector<1x16xf32>,
      %c0_21 = arith.constant 0 : index
      %c0_22 = arith.constant 0 : index
      %23 = vector.load %arg7[%c0_21, %c0_22] : memref<1x16xf32, #tpu.memory_space<vmem>>, vector<1x16xf32>
      %c0_23 = arith.constant 0 : index
      %c0_24 = arith.constant 0 : index
      %24 = vector.load %arg5[%c0_23, %c0_24] : memref<1x16xf32, #tpu.memory_space<vmem>>, vector<1x16xf32>
      tpu.vector_store %arg5[%c0_23, %c0_24], %23 {strides = array<i32>} : memref<1x16xf32, #tpu.memory_space<vmem>>, vector<1x16xf32>,
    } else {
    }
    return
  }
  func.func @transform_0(%arg0: i32) -> (i32, i32) {
    %c0_i32 = arith.constant 0 : i32
    %c0_i32_0 = arith.constant 0 : i32
    return %arg0, %c0_i32 : i32, i32
  }
  func.func @transform_1(%arg0: i32) -> (i32, i32) {
    %c0_i32 = arith.constant 0 : i32
    %c0_i32_0 = arith.constant 0 : i32
    %c0_i32_1 = arith.constant 0 : i32
    return %c0_i32, %c0_i32_0 : i32, i32
  }
  func.func @transform_2(%arg0: i32) -> (i32, i32) {
    %c0_i32 = arith.constant 0 : i32
    %c0_i32_0 = arith.constant 0 : i32
    return %arg0, %c0_i32 : i32, i32
  }
  func.func @transform_3(%arg0: i32) -> (i32, i32) {
    %c0_i32 = arith.constant 0 : i32
    %c0_i32_0 = arith.constant 0 : i32
    %c0_i32_1 = arith.constant 0 : i32
    return %c0_i32, %c0_i32_0 : i32, i32
  }
  func.func @transform_4(%arg0: i32) -> (i32, i32) {
    %c0_i32 = arith.constant 0 : i32
    %c0_i32_0 = arith.constant 0 : i32
    %c0_i32_1 = arith.constant 0 : i32
    return %c0_i32, %c0_i32_0 : i32, i32
  }
}

module attributes {stable_mosaic.version = 11 : i64} {
  func.func @_bn_relu_split_kernel(%arg0: i32, %arg1: memref<64x16xf32, #tpu.memory_space<vmem>>, %arg2: memref<1x16xf32, #tpu.memory_space<vmem>>, %arg3: memref<1x16xf32, #tpu.memory_space<vmem>>, %arg4: memref<64x8xf32, #tpu.memory_space<vmem>>, %arg5: memref<64x8xf32, #tpu.memory_space<vmem>>) attributes {dimension_semantics = [#tpu.dimension_semantics<parallel>], iteration_bounds = array<i64: 2>, scalar_prefetch = 0 : i64, scratch_operands = 0 : i64, tpu.core_type = #tpu.core_type<tc>, window_params = [{transform_indices = @transform_0, window_bounds = array<i64: 64, 16>}, {pipeline_mode = #tpu.pipeline_mode<synchronous>, transform_indices = @transform_1, window_bounds = array<i64: 1, 16>}, {pipeline_mode = #tpu.pipeline_mode<synchronous>, transform_indices = @transform_2, window_bounds = array<i64: 1, 16>}, {transform_indices = @transform_3, window_bounds = array<i64: 64, 8>}, {transform_indices = @transform_4, window_bounds = array<i64: 64, 8>}]} {
    %c0 = arith.constant 0 : index
    %c0_0 = arith.constant 0 : index
    %0 = vector.load %arg1[%c0, %c0_0] : memref<64x16xf32, #tpu.memory_space<vmem>>, vector<64x8xf32>
    %c0_1 = arith.constant 0 : index
    %c0_2 = arith.constant 0 : index
    %1 = vector.load %arg2[%c0_1, %c0_2] : memref<1x16xf32, #tpu.memory_space<vmem>>, vector<1x8xf32>
    %2 = vector.broadcast %1 : vector<1x8xf32> to vector<64x8xf32>
    %3 = arith.mulf %0, %2 : vector<64x8xf32>
    %c0_3 = arith.constant 0 : index
    %c0_4 = arith.constant 0 : index
    %4 = vector.load %arg3[%c0_3, %c0_4] : memref<1x16xf32, #tpu.memory_space<vmem>>, vector<1x8xf32>
    %5 = vector.broadcast %4 : vector<1x8xf32> to vector<64x8xf32>
    %6 = arith.addf %3, %5 : vector<64x8xf32>
    %c0_5 = arith.constant 0 : index
    %c8 = arith.constant 8 : index
    %7 = vector.load %arg1[%c0_5, %c8] : memref<64x16xf32, #tpu.memory_space<vmem>>, vector<64x8xf32>
    %c0_6 = arith.constant 0 : index
    %c8_7 = arith.constant 8 : index
    %8 = vector.load %arg2[%c0_6, %c8_7] : memref<1x16xf32, #tpu.memory_space<vmem>>, vector<1x8xf32>
    %9 = vector.broadcast %8 : vector<1x8xf32> to vector<64x8xf32>
    %10 = arith.mulf %7, %9 : vector<64x8xf32>
    %c0_8 = arith.constant 0 : index
    %c8_9 = arith.constant 8 : index
    %11 = vector.load %arg3[%c0_8, %c8_9] : memref<1x16xf32, #tpu.memory_space<vmem>>, vector<1x8xf32>
    %12 = vector.broadcast %11 : vector<1x8xf32> to vector<64x8xf32>
    %13 = arith.addf %10, %12 : vector<64x8xf32>
    %cst = arith.constant 0.000000e+00 : f32
    %14 = vector.broadcast %cst : f32 to vector<64x8xf32>
    %15 = arith.maximumf %6, %14 : vector<64x8xf32>
    %c0_10 = arith.constant 0 : index
    %c0_11 = arith.constant 0 : index
    %16 = vector.load %arg4[%c0_10, %c0_11] : memref<64x8xf32, #tpu.memory_space<vmem>>, vector<64x8xf32>
    tpu.vector_store %arg4[%c0_10, %c0_11], %15 {strides = array<i32>} : memref<64x8xf32, #tpu.memory_space<vmem>>, vector<64x8xf32>,
    %c0_12 = arith.constant 0 : index
    %c0_13 = arith.constant 0 : index
    %17 = vector.load %arg5[%c0_12, %c0_13] : memref<64x8xf32, #tpu.memory_space<vmem>>, vector<64x8xf32>
    tpu.vector_store %arg5[%c0_12, %c0_13], %13 {strides = array<i32>} : memref<64x8xf32, #tpu.memory_space<vmem>>, vector<64x8xf32>,
    return
  }
  func.func @transform_0(%arg0: i32) -> (i32, i32) {
    %c0_i32 = arith.constant 0 : i32
    %c0_i32_0 = arith.constant 0 : i32
    return %arg0, %c0_i32 : i32, i32
  }
  func.func @transform_1(%arg0: i32) -> (i32, i32) {
    %c0_i32 = arith.constant 0 : i32
    %c0_i32_0 = arith.constant 0 : i32
    %c0_i32_1 = arith.constant 0 : i32
    return %c0_i32, %c0_i32_0 : i32, i32
  }
  func.func @transform_2(%arg0: i32) -> (i32, i32) {
    %c0_i32 = arith.constant 0 : i32
    %c0_i32_0 = arith.constant 0 : i32
    %c0_i32_1 = arith.constant 0 : i32
    return %c0_i32, %c0_i32_0 : i32, i32
  }
  func.func @transform_3(%arg0: i32) -> (i32, i32) {
    %c0_i32 = arith.constant 0 : i32
    %c0_i32_0 = arith.constant 0 : i32
    return %arg0, %c0_i32 : i32, i32
  }
  func.func @transform_4(%arg0: i32) -> (i32, i32) {
    %c0_i32 = arith.constant 0 : i32
    %c0_i32_0 = arith.constant 0 : i32
    return %arg0, %c0_i32 : i32, i32
  }
}

module attributes {stable_mosaic.version = 11 : i64} {
  func.func @_conv_stats_kernel(%arg0: i32, %arg1: memref<64x72xbf16, #tpu.memory_space<vmem>>, %arg2: memref<72x8xbf16, #tpu.memory_space<vmem>>, %arg3: memref<64x8xf32, #tpu.memory_space<vmem>>, %arg4: memref<1x8xf32, #tpu.memory_space<vmem>>, %arg5: memref<1x8xf32, #tpu.memory_space<vmem>>, %arg6: memref<1x8xf32, #tpu.memory_space<vmem>>, %arg7: memref<1x8xf32, #tpu.memory_space<vmem>>) attributes {dimension_semantics = [#tpu.dimension_semantics<arbitrary>], iteration_bounds = array<i64: 2>, scalar_prefetch = 0 : i64, scratch_operands = 2 : i64, tpu.core_type = #tpu.core_type<tc>, window_params = [{transform_indices = @transform_0, window_bounds = array<i64: 64, 72>}, {pipeline_mode = #tpu.pipeline_mode<synchronous>, transform_indices = @transform_1, window_bounds = array<i64: 72, 8>}, {transform_indices = @transform_2, window_bounds = array<i64: 64, 8>}, {pipeline_mode = #tpu.pipeline_mode<synchronous>, transform_indices = @transform_3, window_bounds = array<i64: 1, 8>}, {pipeline_mode = #tpu.pipeline_mode<synchronous>, transform_indices = @transform_4, window_bounds = array<i64: 1, 8>}]} {
    %c0_i32 = arith.constant 0 : i32
    %0 = arith.cmpi eq, %arg0, %c0_i32 : i32
    %1 = arith.extui %0 : i1 to i32
    %c0_i32_0 = arith.constant 0 : i32
    %2 = arith.cmpi ne, %1, %c0_i32_0 : i32
    scf.if %2 {
      %cst_17 = arith.constant 0.000000e+00 : f32
      %21 = vector.broadcast %cst_17 : f32 to vector<1x8xf32>
      %c0_18 = arith.constant 0 : index
      %c0_19 = arith.constant 0 : index
      %22 = vector.load %arg6[%c0_18, %c0_19] : memref<1x8xf32, #tpu.memory_space<vmem>>, vector<1x8xf32>
      tpu.vector_store %arg6[%c0_18, %c0_19], %21 {strides = array<i32>} : memref<1x8xf32, #tpu.memory_space<vmem>>, vector<1x8xf32>,
      %cst_20 = arith.constant 0.000000e+00 : f32
      %23 = vector.broadcast %cst_20 : f32 to vector<1x8xf32>
      %c0_21 = arith.constant 0 : index
      %c0_22 = arith.constant 0 : index
      %24 = vector.load %arg7[%c0_21, %c0_22] : memref<1x8xf32, #tpu.memory_space<vmem>>, vector<1x8xf32>
      tpu.vector_store %arg7[%c0_21, %c0_22], %23 {strides = array<i32>} : memref<1x8xf32, #tpu.memory_space<vmem>>, vector<1x8xf32>,
    } else {
    }
    %c0 = arith.constant 0 : index
    %c0_1 = arith.constant 0 : index
    %3 = vector.load %arg1[%c0, %c0_1] : memref<64x72xbf16, #tpu.memory_space<vmem>>, vector<64x72xbf16>
    %c0_2 = arith.constant 0 : index
    %c0_3 = arith.constant 0 : index
    %4 = vector.load %arg2[%c0_2, %c0_3] : memref<72x8xbf16, #tpu.memory_space<vmem>>, vector<72x8xbf16>
    %cst = arith.constant dense<0.000000e+00> : vector<64x8xf32>
    %5 = tpu.matmul %3, %4, %cst {dimension_numbers = #tpu.dot_dimension_numbers<[1], [0], [0], [1], [0, 0, 1, 1], [], []>} : vector<64x72xbf16>, vector<72x8xbf16>, vector<64x8xf32> -> vector<64x8xf32>
    %c0_4 = arith.constant 0 : index
    %c0_5 = arith.constant 0 : index
    %6 = vector.load %arg3[%c0_4, %c0_5] : memref<64x8xf32, #tpu.memory_space<vmem>>, vector<64x8xf32>
    tpu.vector_store %arg3[%c0_4, %c0_5], %5 {strides = array<i32>} : memref<64x8xf32, #tpu.memory_space<vmem>>, vector<64x8xf32>,
    %c0_6 = arith.constant 0 : index
    %c0_7 = arith.constant 0 : index
    %7 = vector.load %arg6[%c0_6, %c0_7] : memref<1x8xf32, #tpu.memory_space<vmem>>, vector<1x8xf32>
    %cst_8 = arith.constant dense<0.000000e+00> : vector<8xf32>
    %8 = vector.multi_reduction <add>, %5, %cst_8 [0] : vector<64x8xf32> to vector<8xf32>
    %9 = vector.shape_cast %8 : vector<8xf32> to vector<1x8xf32>
    %10 = arith.addf %7, %9 : vector<1x8xf32>
    %c0_9 = arith.constant 0 : index
    %c0_10 = arith.constant 0 : index
    %11 = vector.load %arg6[%c0_9, %c0_10] : memref<1x8xf32, #tpu.memory_space<vmem>>, vector<1x8xf32>
    tpu.vector_store %arg6[%c0_9, %c0_10], %10 {strides = array<i32>} : memref<1x8xf32, #tpu.memory_space<vmem>>, vector<1x8xf32>,
    %c0_11 = arith.constant 0 : index
    %c0_12 = arith.constant 0 : index
    %12 = vector.load %arg7[%c0_11, %c0_12] : memref<1x8xf32, #tpu.memory_space<vmem>>, vector<1x8xf32>
    %13 = arith.mulf %5, %5 : vector<64x8xf32>
    %cst_13 = arith.constant dense<0.000000e+00> : vector<8xf32>
    %14 = vector.multi_reduction <add>, %13, %cst_13 [0] : vector<64x8xf32> to vector<8xf32>
    %15 = vector.shape_cast %14 : vector<8xf32> to vector<1x8xf32>
    %16 = arith.addf %12, %15 : vector<1x8xf32>
    %c0_14 = arith.constant 0 : index
    %c0_15 = arith.constant 0 : index
    %17 = vector.load %arg7[%c0_14, %c0_15] : memref<1x8xf32, #tpu.memory_space<vmem>>, vector<1x8xf32>
    tpu.vector_store %arg7[%c0_14, %c0_15], %16 {strides = array<i32>} : memref<1x8xf32, #tpu.memory_space<vmem>>, vector<1x8xf32>,
    %c1_i32 = arith.constant 1 : i32
    %18 = arith.cmpi eq, %arg0, %c1_i32 : i32
    %19 = arith.extui %18 : i1 to i32
    %c0_i32_16 = arith.constant 0 : i32
    %20 = arith.cmpi ne, %19, %c0_i32_16 : i32
    scf.if %20 {
      %c0_17 = arith.constant 0 : index
      %c0_18 = arith.constant 0 : index
      %21 = vector.load %arg6[%c0_17, %c0_18] : memref<1x8xf32, #tpu.memory_space<vmem>>, vector<1x8xf32>
      %c0_19 = arith.constant 0 : index
      %c0_20 = arith.constant 0 : index
      %22 = vector.load %arg4[%c0_19, %c0_20] : memref<1x8xf32, #tpu.memory_space<vmem>>, vector<1x8xf32>
      tpu.vector_store %arg4[%c0_19, %c0_20], %21 {strides = array<i32>} : memref<1x8xf32, #tpu.memory_space<vmem>>, vector<1x8xf32>,
      %c0_21 = arith.constant 0 : index
      %c0_22 = arith.constant 0 : index
      %23 = vector.load %arg7[%c0_21, %c0_22] : memref<1x8xf32, #tpu.memory_space<vmem>>, vector<1x8xf32>
      %c0_23 = arith.constant 0 : index
      %c0_24 = arith.constant 0 : index
      %24 = vector.load %arg5[%c0_23, %c0_24] : memref<1x8xf32, #tpu.memory_space<vmem>>, vector<1x8xf32>
      tpu.vector_store %arg5[%c0_23, %c0_24], %23 {strides = array<i32>} : memref<1x8xf32, #tpu.memory_space<vmem>>, vector<1x8xf32>,
    } else {
    }
    return
  }
  func.func @transform_0(%arg0: i32) -> (i32, i32) {
    %c0_i32 = arith.constant 0 : i32
    %c0_i32_0 = arith.constant 0 : i32
    return %arg0, %c0_i32 : i32, i32
  }
  func.func @transform_1(%arg0: i32) -> (i32, i32) {
    %c0_i32 = arith.constant 0 : i32
    %c0_i32_0 = arith.constant 0 : i32
    %c0_i32_1 = arith.constant 0 : i32
    return %c0_i32, %c0_i32_0 : i32, i32
  }
  func.func @transform_2(%arg0: i32) -> (i32, i32) {
    %c0_i32 = arith.constant 0 : i32
    %c0_i32_0 = arith.constant 0 : i32
    return %arg0, %c0_i32 : i32, i32
  }
  func.func @transform_3(%arg0: i32) -> (i32, i32) {
    %c0_i32 = arith.constant 0 : i32
    %c0_i32_0 = arith.constant 0 : i32
    %c0_i32_1 = arith.constant 0 : i32
    return %c0_i32, %c0_i32_0 : i32, i32
  }
  func.func @transform_4(%arg0: i32) -> (i32, i32) {
    %c0_i32 = arith.constant 0 : i32
    %c0_i32_0 = arith.constant 0 : i32
    %c0_i32_1 = arith.constant 0 : i32
    return %c0_i32, %c0_i32_0 : i32, i32
  }
}

module attributes {stable_mosaic.version = 11 : i64} {
  func.func @_bn_add_relu_kernel(%arg0: i32, %arg1: memref<64x8xf32, #tpu.memory_space<vmem>>, %arg2: memref<1x8xf32, #tpu.memory_space<vmem>>, %arg3: memref<1x8xf32, #tpu.memory_space<vmem>>, %arg4: memref<64x8xf32, #tpu.memory_space<vmem>>, %arg5: memref<64x8xf32, #tpu.memory_space<vmem>>) attributes {dimension_semantics = [#tpu.dimension_semantics<parallel>], iteration_bounds = array<i64: 2>, scalar_prefetch = 0 : i64, scratch_operands = 0 : i64, tpu.core_type = #tpu.core_type<tc>, window_params = [{transform_indices = @transform_0, window_bounds = array<i64: 64, 8>}, {pipeline_mode = #tpu.pipeline_mode<synchronous>, transform_indices = @transform_1, window_bounds = array<i64: 1, 8>}, {pipeline_mode = #tpu.pipeline_mode<synchronous>, transform_indices = @transform_2, window_bounds = array<i64: 1, 8>}, {transform_indices = @transform_3, window_bounds = array<i64: 64, 8>}, {transform_indices = @transform_4, window_bounds = array<i64: 64, 8>}]} {
    %c0 = arith.constant 0 : index
    %c0_0 = arith.constant 0 : index
    %0 = vector.load %arg1[%c0, %c0_0] : memref<64x8xf32, #tpu.memory_space<vmem>>, vector<64x8xf32>
    %c0_1 = arith.constant 0 : index
    %c0_2 = arith.constant 0 : index
    %1 = vector.load %arg2[%c0_1, %c0_2] : memref<1x8xf32, #tpu.memory_space<vmem>>, vector<1x8xf32>
    %2 = vector.broadcast %1 : vector<1x8xf32> to vector<64x8xf32>
    %3 = arith.mulf %0, %2 : vector<64x8xf32>
    %c0_3 = arith.constant 0 : index
    %c0_4 = arith.constant 0 : index
    %4 = vector.load %arg3[%c0_3, %c0_4] : memref<1x8xf32, #tpu.memory_space<vmem>>, vector<1x8xf32>
    %5 = vector.broadcast %4 : vector<1x8xf32> to vector<64x8xf32>
    %6 = arith.addf %3, %5 : vector<64x8xf32>
    %c0_5 = arith.constant 0 : index
    %c0_6 = arith.constant 0 : index
    %7 = vector.load %arg4[%c0_5, %c0_6] : memref<64x8xf32, #tpu.memory_space<vmem>>, vector<64x8xf32>
    %8 = arith.addf %7, %6 : vector<64x8xf32>
    %cst = arith.constant 0.000000e+00 : f32
    %9 = vector.broadcast %cst : f32 to vector<64x8xf32>
    %10 = arith.maximumf %8, %9 : vector<64x8xf32>
    %c0_7 = arith.constant 0 : index
    %c0_8 = arith.constant 0 : index
    %11 = vector.load %arg5[%c0_7, %c0_8] : memref<64x8xf32, #tpu.memory_space<vmem>>, vector<64x8xf32>
    tpu.vector_store %arg5[%c0_7, %c0_8], %10 {strides = array<i32>} : memref<64x8xf32, #tpu.memory_space<vmem>>, vector<64x8xf32>,
    return
  }
  func.func @transform_0(%arg0: i32) -> (i32, i32) {
    %c0_i32 = arith.constant 0 : i32
    %c0_i32_0 = arith.constant 0 : i32
    return %arg0, %c0_i32 : i32, i32
  }
  func.func @transform_1(%arg0: i32) -> (i32, i32) {
    %c0_i32 = arith.constant 0 : i32
    %c0_i32_0 = arith.constant 0 : i32
    %c0_i32_1 = arith.constant 0 : i32
    return %c0_i32, %c0_i32_0 : i32, i32
  }
  func.func @transform_2(%arg0: i32) -> (i32, i32) {
    %c0_i32 = arith.constant 0 : i32
    %c0_i32_0 = arith.constant 0 : i32
    %c0_i32_1 = arith.constant 0 : i32
    return %c0_i32, %c0_i32_0 : i32, i32
  }
  func.func @transform_3(%arg0: i32) -> (i32, i32) {
    %c0_i32 = arith.constant 0 : i32
    %c0_i32_0 = arith.constant 0 : i32
    return %arg0, %c0_i32 : i32, i32
  }
  func.func @transform_4(%arg0: i32) -> (i32, i32) {
    %c0_i32 = arith.constant 0 : i32
    %c0_i32_0 = arith.constant 0 : i32
    return %arg0, %c0_i32 : i32, i32
  }
}

</mosaic_0001>

<llo_original>
// kernel: res_block_forward.5
$region0: #{res_block_forward.5}
  #allocation0 [shape = 'u32[]', space=smem, size = 0x4, offset = 0x4, fixed_abs, tag = 'smem constant byte address 0x4 - core index']
  #allocation1 [shape = 'u32[72,128]{1,0:T(1,128)}', space=vmem, size = 0x9000, scoped, tag = 'internal scratch']
  %s0 = inlined_call_operand.vmem [shape: f32[128,16], index: 0, kind: input, shape index: {}]
  %s1 = inlined_call_operand.vmem [shape: f32[1,16], index: 1, kind: input, shape index: {}]
  %s2 = inlined_call_operand.vmem [shape: f32[1,16], index: 2, kind: input, shape index: {}]
  %s3 = inlined_call_operand.vmem [shape: f32[128,8], index: 3, kind: output, shape index: {0}]
  %s4 = inlined_call_operand.vmem [shape: f32[128,8], index: 4, kind: output, shape index: {1}]
  %5 = xla_tuple %s3, %s4
  %s6 = sld [smem:[#allocation0]]
  $region53: #{res_block_forward.5} parent=0
    _
  %s8 = ssub.s32 1, %s6
  %s9 = scalar_select 0, %s8, %s6
  loop: start=0, step=1, limit=4
  $region2: #{res_block_forward.5} parent=0 // loop_pre_header
    _
  $region3: #{res_block_forward.5} parent=0 // loop_header
    %s11 = sphi 0, %s15
    %p12 = scmp.ge.s32.totalorder %s11, 4
    %s21 = sphi 0, %s23
    %s24 = sphi 0, %s21
    %s25 = sphi 0, %s24
    %s41 = sphi 0, %s25
    %s45 = sphi 0, %s45
    %s47 = sphi 0, %s45
    %s48 = sphi 0, %s47
    %s62 = sphi 0, %s48
    %s66 = sphi 0, %s66
    %s68 = sphi 0, %s66
    %s69 = sphi 0, %s68
    %s83 = sphi 0, %s69
    %s89 = sphi 0, %s91
    %s92 = sphi 0, %s89
    %s93 = sphi 0, %s92
    %s109 = sphi 0, %s93
    %s115 = sphi 0, %s117
    %s118 = sphi 0, %s115
    %s119 = sphi 0, %s118
    %s135 = sphi 0, %s119
  $region4: #{res_block_forward.5} parent=0 // loop_header_branch
    %14 = sbr.rel (%p12) target = $region8
  $region5: #{res_block_forward.5} parent=0 // loop_body
    %s16 = ssub.s32 %s11, 1
    %s17 = ssub.s32 %s11, 2
    %s18 = sadd.s32 %s11, 1
    %s19 = ssub.s32 %s11, %s18
    %p20 = scmp.eq.s32.totalorder %s19, 0
    %s22 = sadd.s32 %s21, 1
    %s23 = scalar_select %p20, %s21, %s22
    %p26 = pneg %p20
    %p27 = scmp.eq.s32.totalorder %s11, 1
    %p28 = por %p26, %p27
    %p29 = scmp.ne.s32.totalorder %s21, %s24
    %p30 = scmp.eq.s32.totalorder %s11, 0
    %p31 = por %p29, %p30
    %p32 = scmp.ne.s32.totalorder %s21, %s24
    %p33 = scmp.eq.s32.totalorder %s16, 1
    %p34 = por %p32, %p33
    %p35 = scmp.ne.s32.totalorder %s24, %s25
    %p36 = scmp.eq.s32.totalorder %s16, 0
    %p37 = por %p35, %p36
    %p38 = scmp.ne.s32.totalorder %s24, %s25
    %p39 = scmp.eq.s32.totalorder %s17, 1
    %p40 = por %p38, %p39
    %p42 = scmp.ne.s32.totalorder %s25, %s41
    %p43 = scmp.eq.s32.totalorder %s17, 0
    %p44 = por %p42, %p43
    %s46 = sadd.s32 %s45, 1
    %p49 = scmp.eq.s32.totalorder %s11, 1
    %p50 = scmp.ne.s32.totalorder %s45, %s47
    %p51 = scmp.eq.s32.totalorder %s11, 0
    %p52 = por %p50, %p51
    %p53 = scmp.ne.s32.totalorder %s45, %s47
    %p54 = scmp.eq.s32.totalorder %s16, 1
    %p55 = por %p53, %p54
    %p56 = scmp.ne.s32.totalorder %s47, %s48
    %p57 = scmp.eq.s32.totalorder %s16, 0
    %p58 = por %p56, %p57
    %p59 = scmp.ne.s32.totalorder %s47, %s48
    %p60 = scmp.eq.s32.totalorder %s17, 1
    %p61 = por %p59, %p60
    %p63 = scmp.ne.s32.totalorder %s48, %s62
    %p64 = scmp.eq.s32.totalorder %s17, 0
    %p65 = por %p63, %p64
    %s67 = sadd.s32 %s66, 1
    %p70 = scmp.eq.s32.totalorder %s11, 1
    %p71 = scmp.ne.s32.totalorder %s66, %s68
    %p72 = scmp.eq.s32.totalorder %s11, 0
    %p73 = por %p71, %p72
    %p74 = scmp.ne.s32.totalorder %s66, %s68
    %p75 = scmp.eq.s32.totalorder %s16, 1
    %p76 = por %p74, %p75
    %p77 = scmp.ne.s32.totalorder %s68, %s69
    %p78 = scmp.eq.s32.totalorder %s16, 0
    %p79 = por %p77, %p78
    %p80 = scmp.ne.s32.totalorder %s68, %s69
    %p81 = scmp.eq.s32.totalorder %s17, 1
    %p82 = por %p80, %p81
    %p84 = scmp.ne.s32.totalorder %s69, %s83
    %p85 = scmp.eq.s32.totalorder %s17, 0
    %p86 = por %p84, %p85
    %s87 = ssub.s32 %s11, %s18
    %p88 = scmp.eq.s32.totalorder %s87, 0
    %s90 = sadd.s32 %s89, 1
    %s91 = scalar_select %p88, %s89, %s90
    %p94 = pneg %p88
    %p95 = scmp.eq.s32.totalorder %s11, 1
    %p96 = por %p94, %p95
    %p97 = scmp.ne.s32.totalorder %s89, %s92
    %p98 = scmp.eq.s32.totalorder %s11, 0
    %p99 = por %p97, %p98
    %p100 = scmp.ne.s32.totalorder %s89, %s92
    %p101 = scmp.eq.s32.totalorder %s16, 1
    %p102 = por %p100, %p101
    %p103 = scmp.ne.s32.totalorder %s92, %s93
    %p104 = scmp.eq.s32.totalorder %s16, 0
    %p105 = por %p103, %p104
    %p106 = scmp.ne.s32.totalorder %s92, %s93
    %p107 = scmp.eq.s32.totalorder %s17, 1
    %p108 = por %p106, %p107
    %p110 = scmp.ne.s32.totalorder %s93, %s109
    %p111 = scmp.eq.s32.totalorder %s17, 0
    %p112 = por %p110, %p111
    %s113 = ssub.s32 %s11, %s18
    %p114 = scmp.eq.s32.totalorder %s113, 0
    %s116 = sadd.s32 %s115, 1
    %s117 = scalar_select %p114, %s115, %s116
    %p120 = pneg %p114
    %p121 = scmp.eq.s32.totalorder %s11, 1
    %p122 = por %p120, %p121
    %p123 = scmp.ne.s32.totalorder %s115, %s118
    %p124 = scmp.eq.s32.totalorder %s11, 0
    %p125 = por %p123, %p124
    %p126 = scmp.ne.s32.totalorder %s115, %s118
    %p127 = scmp.eq.s32.totalorder %s16, 1
    %p128 = por %p126, %p127
    %p129 = scmp.ne.s32.totalorder %s118, %s119
    %p130 = scmp.eq.s32.totalorder %s16, 0
    %p131 = por %p129, %p130
    %p132 = scmp.ne.s32.totalorder %s118, %s119
    %p133 = scmp.eq.s32.totalorder %s17, 1
    %p134 = por %p132, %p133
    %p136 = scmp.ne.s32.totalorder %s119, %s135
    %p137 = scmp.eq.s32.totalorder %s17, 0
    %p138 = por %p136, %p137
    %p139 = scmp.le.s32.totalorder 1, %s11
    %p140 = scmp.lt.s32.totalorder %s11, 3
    %p141 = pnand %p139, %p140
    %p142 = pneg %p141
    // Predicated region
    $region9: #{res_block_forward.5} parent=5 // pred_check
      _
    $region10: #{res_block_forward.5} parent=5 // pred_check_branch
      %144 = sbr.rel (%p141) target = $region12
    $region11: #{res_block_forward.5} parent=5 // pred_region
      %s145 = ssub.s32 %s11, 1
      // Predicated region
      $region13: #{res_block_forward.5} parent=11 // pred_check
        %p146 = pneg %p58
      $region14: #{res_block_forward.5} parent=11 // pred_check_branch
        %148 = sbr.rel (%p146) target = $region16
      $region15: #{res_block_forward.5} parent=11 // pred_region
        _
      $region16: #{res_block_forward.5} parent=11 // pred_fallthru
        _
      // Predicated region
      $region17: #{res_block_forward.5} parent=11 // pred_check
        %p149 = pneg %p79
      $region18: #{res_block_forward.5} parent=11 // pred_check_branch
        %151 = sbr.rel (%p149) target = $region20
      $region19: #{res_block_forward.5} parent=11 // pred_region
        _
      $region20: #{res_block_forward.5} parent=11 // pred_fallthru
        _
    $region12: #{res_block_forward.5} parent=5 // pred_fallthru
      _
    %p152 = scmp.lt.s32.totalorder %s11, 2
    // Predicated region
    $region21: #{res_block_forward.5} parent=5 // pred_check
      %p153 = pneg %p152
    $region22: #{res_block_forward.5} parent=5 // pred_check_branch
      %155 = sbr.rel (%p153) target = $region24
    $region23: #{res_block_forward.5} parent=5 // pred_region
      // Predicated region
      $region25: #{res_block_forward.5} parent=23 // pred_check
        %p156 = pneg %p31
      $region26: #{res_block_forward.5} parent=23 // pred_check_branch
        %158 = sbr.rel (%p156) target = $region28
      $region27: #{res_block_forward.5} parent=23 // pred_region
        %s159 = smul.u32 8, %s11
        %p160 = scmp.lt.s32.totalorder %s159, 15
        %s161 = scalar_select %p160, %s159, 15
        %s162 = smul.addr %s161, 8
        %s163 = scalar_lea.vmem %s0, %s162
        %s164 = smul.u32 8, %s11
      $region28: #{res_block_forward.5} parent=23 // pred_fallthru
        _
    $region24: #{res_block_forward.5} parent=5 // pred_fallthru
      _
    %p165 = scmp.le.s32.totalorder 1, %s11
    %p166 = scmp.lt.s32.totalorder %s11, 3
    %p167 = pnand %p165, %p166
    %p168 = pneg %p167
    // Predicated region
    $region29: #{res_block_forward.5} parent=5 // pred_check
      _
    $region30: #{res_block_forward.5} parent=5 // pred_check_branch
      %170 = sbr.rel (%p167) target = $region32
    $region31: #{res_block_forward.5} parent=5 // pred_region
      %s171 = ssub.s32 %s11, 1
      %s172 = smul.u32 8, %s16
      %p173 = scmp.lt.s32.totalorder %s172, 15
      %s174 = scalar_select %p173, %s172, 15
      %s175 = smul.addr %s174, 8
      %s176 = scalar_lea.vmem %s0, %s175
      %p177 = pneg %p37
      %p178 = pneg %p34
      %p179 = pneg %p58
      %p180 = pneg %p55
      %p181 = pneg %p79
      %p182 = pneg %p76
      %p183 = pneg %p105
      %p184 = pneg %p102
      %s185 = smul.u32 8, %s16
      %p186 = scmp.lt.s32.totalorder %s185, 15
      %s187 = scalar_select %p186, %s185, 15
      %s188 = smul.addr %s187, 8
      %s189 = scalar_lea.vmem %s3, %s188
      %p190 = pneg %p131
      %p191 = pneg %p128
      %s192 = smul.u32 8, %s16
      %p193 = scmp.lt.s32.totalorder %s192, 15
      %s194 = scalar_select %p193, %s192, 15
      %s195 = smul.addr %s194, 8
      %s196 = scalar_lea.vmem %s4, %s195
      %s197 = smul.u32 8, %s16
      %p198 = scmp.lt.s32.totalorder %s197, 15
      %s199 = scalar_select %p198, %s197, 15
      %s200 = smul.addr %s199, 8
      %s201 = scalar_lea.vmem %s0, %s200
      %s202 = smul.u32 8, %s16
      %s203 = smul.u32 8, %s16
      %p204 = scmp.lt.s32.totalorder %s203, 15
      %s205 = scalar_select %p204, %s203, 15
      %s206 = smul.addr %s205, 8
      %s207 = scalar_lea.vmem %s3, %s206
      %s208 = smul.u32 8, %s16
      %s209 = smul.u32 8, %s16
      %p210 = scmp.lt.s32.totalorder %s209, 15
      %s211 = scalar_select %p210, %s209, 15
      %s212 = smul.addr %s211, 8
      %s213 = scalar_lea.vmem %s4, %s212
      %s214 = smul.u32 8, %s16
      %v215 = vld [vmem:[%s201] sm:$0xff]
      %v216 = vld [vmem:[%s201 + $0x8] sm:$0xff]
      %v217 = vld [vmem:[%s201 + $0x10] sm:$0xff]
      %v218 = vld [vmem:[%s201 + $0x18] sm:$0xff]
      %v219 = vld [vmem:[%s201 + $0x20] sm:$0xff]
      %v220 = vld [vmem:[%s201 + $0x28] sm:$0xff]
      %v221 = vld [vmem:[%s201 + $0x30] sm:$0xff]
      %v222 = vld [vmem:[%s201 + $0x38] sm:$0xff]
      %v223 = vld [vmem:[%s1] sm:$0x1]
      %v225 = vperm.slane %v223, 0
      %v227 = vmul.f32 %v215, %v225
      %v228 = vmul.f32 %v216, %v225
      %v229 = vmul.f32 %v217, %v225
      %v230 = vmul.f32 %v218, %v225
      %v231 = vmul.f32 %v219, %v225
      %v232 = vmul.f32 %v220, %v225
      %v233 = vmul.f32 %v221, %v225
      %v234 = vmul.f32 %v222, %v225
      %v235 = vld [vmem:[%s2] sm:$0x1]
      %v237 = vperm.slane %v235, 0
      %v239 = vadd.f32 %v227, %v237
      %v240 = vadd.f32 %v228, %v237
      %v241 = vadd.f32 %v229, %v237
      %v242 = vadd.f32 %v230, %v237
      %v243 = vadd.f32 %v231, %v237
      %v244 = vadd.f32 %v232, %v237
      %v245 = vadd.f32 %v233, %v237
      %v246 = vadd.f32 %v234, %v237
      %v247 = vmax.f32 %v239, 0.0
      %v248 = vmax.f32 %v240, 0.0
      %v249 = vmax.f32 %v241, 0.0
      %v250 = vmax.f32 %v242, 0.0
      %v251 = vmax.f32 %v243, 0.0
      %v252 = vmax.f32 %v244, 0.0
      %v253 = vmax.f32 %v245, 0.0
      %v254 = vmax.f32 %v246, 0.0
      %vm255 = vcmask 64512
      %256 = vst.msk [vmem:[%s207] sm:$0xff] %vm255, %v247
      %257 = vst.msk [vmem:[%s207 + $0x8] sm:$0xff] %vm255, %v248
      %258 = vst.msk [vmem:[%s207 + $0x10] sm:$0xff] %vm255, %v249
      %259 = vst.msk [vmem:[%s207 + $0x18] sm:$0xff] %vm255, %v250
      %260 = vst.msk [vmem:[%s207 + $0x20] sm:$0xff] %vm255, %v251
      %261 = vst.msk [vmem:[%s207 + $0x28] sm:$0xff] %vm255, %v252
      %262 = vst.msk [vmem:[%s207 + $0x30] sm:$0xff] %vm255, %v253
      %263 = vst.msk [vmem:[%s207 + $0x38] sm:$0xff] %vm255, %v254
      %272 = vrot.lane.b32.xlu0 %v239, 120
      %v273 = vpop.permute.xlu0 %272
      %274 = vrot.lane.b32.xlu0 %v240, 120
      %v275 = vpop.permute.xlu0 %274
      %276 = vrot.lane.b32.xlu0 %v241, 120
      %v277 = vpop.permute.xlu0 %276
      %278 = vrot.lane.b32.xlu0 %v242, 120
      %v279 = vpop.permute.xlu0 %278
      %280 = vrot.lane.b32.xlu0 %v243, 120
      %v281 = vpop.permute.xlu0 %280
      %282 = vrot.lane.b32.xlu0 %v244, 120
      %v283 = vpop.permute.xlu0 %282
      %284 = vrot.lane.b32.xlu0 %v245, 120
      %v285 = vpop.permute.xlu0 %284
      %286 = vrot.lane.b32.xlu0 %v246, 120
      %v287 = vpop.permute.xlu0 %286
      %296 = vst.msk [vmem:[%s213] sm:$0xff] %vm255, %v273
      %297 = vst.msk [vmem:[%s213 + $0x8] sm:$0xff] %vm255, %v275
      %298 = vst.msk [vmem:[%s213 + $0x10] sm:$0xff] %vm255, %v277
      %299 = vst.msk [vmem:[%s213 + $0x18] sm:$0xff] %vm255, %v279
      %300 = vst.msk [vmem:[%s213 + $0x20] sm:$0xff] %vm255, %v281
      %301 = vst.msk [vmem:[%s213 + $0x28] sm:$0xff] %vm255, %v283
      %302 = vst.msk [vmem:[%s213 + $0x30] sm:$0xff] %vm255, %v285
      %303 = vst.msk [vmem:[%s213 + $0x38] sm:$0xff] %vm255, %v287
      %s304 = smul.u32 8, %s16
      %p305 = scmp.lt.s32.totalorder %s304, 15
      %s306 = scalar_select %p305, %s304, 15
      %s307 = smul.addr %s306, 8
      %s308 = scalar_lea.vmem %s3, %s307
      %s309 = smul.u32 8, %s16
      %p310 = scmp.lt.s32.totalorder %s309, 15
      %s311 = scalar_select %p310, %s309, 15
      %s312 = smul.addr %s311, 8
      %s313 = scalar_lea.vmem %s4, %s312
      // Predicated region
      $region33: #{res_block_forward.5} parent=31 // pred_check
        %p314 = pneg %p102
      $region34: #{res_block_forward.5} parent=31 // pred_check_branch
        %316 = sbr.rel (%p314) target = $region36
      $region35: #{res_block_forward.5} parent=31 // pred_region
        %s317 = smul.u32 8, %s16
      $region36: #{res_block_forward.5} parent=31 // pred_fallthru
        _
      // Predicated region
      $region37: #{res_block_forward.5} parent=31 // pred_check
        %p318 = pneg %p128
      $region38: #{res_block_forward.5} parent=31 // pred_check_branch
        %320 = sbr.rel (%p318) target = $region40
      $region39: #{res_block_forward.5} parent=31 // pred_region
        %s321 = smul.u32 8, %s16
      $region40: #{res_block_forward.5} parent=31 // pred_fallthru
        _
    $region32: #{res_block_forward.5} parent=5 // pred_fallthru
      _
    %p322 = scmp.le.s32.totalorder 2, %s11
    // Predicated region
    $region41: #{res_block_forward.5} parent=5 // pred_check
      %p323 = pneg %p322
    $region42: #{res_block_forward.5} parent=5 // pred_check_branch
      %325 = sbr.rel (%p323) target = $region44
    $region43: #{res_block_forward.5} parent=5 // pred_region
      %s326 = ssub.s32 %s11, 2
      // Predicated region
      $region45: #{res_block_forward.5} parent=43 // pred_check
        %p327 = pneg %p108
      $region46: #{res_block_forward.5} parent=43 // pred_check_branch
        %329 = sbr.rel (%p327) target = $region48
      $region47: #{res_block_forward.5} parent=43 // pred_region
        %s330 = smul.u32 8, %s17
        %p331 = scmp.lt.s32.totalorder %s330, 15
        %s332 = scalar_select %p331, %s330, 15
        %s333 = smul.addr %s332, 8
        %s334 = scalar_lea.vmem %s3, %s333
      $region48: #{res_block_forward.5} parent=43 // pred_fallthru
        _
      // Predicated region
      $region49: #{res_block_forward.5} parent=43 // pred_check
        %p335 = pneg %p134
      $region50: #{res_block_forward.5} parent=43 // pred_check_branch
        %337 = sbr.rel (%p335) target = $region52
      $region51: #{res_block_forward.5} parent=43 // pred_region
        %s338 = smul.u32 8, %s17
        %p339 = scmp.lt.s32.totalorder %s338, 15
        %s340 = scalar_select %p339, %s338, 15
        %s341 = smul.addr %s340, 8
        %s342 = scalar_lea.vmem %s4, %s341
      $region52: #{res_block_forward.5} parent=43 // pred_fallthru
        _
    $region44: #{res_block_forward.5} parent=5 // pred_fallthru
      _
  $region6: #{res_block_forward.5} parent=0 // loop_footer
    %s15 = sadd.s32 1, %s11
  $region7: #{res_block_forward.5} parent=0 // loop_footer_branch
    %10 = sbr.rel target = $region3
  $region8: #{res_block_forward.5} parent=0 // loop_exit
    _

// kernel: res_block_forward.4
$region0: #{res_block_forward.4}
  #allocation0 [shape = 'u32[]', space=smem, size = 0x4, offset = 0x4, fixed_abs, tag = 'smem constant byte address 0x4 - core index']
  #allocation1 [shape = 'u32[72,128]{1,0:T(1,128)}', space=vmem, size = 0x9000, scoped, tag = 'internal scratch']
  #allocation2 [shape = 'f32[1,16]{1,0:T(1,128)}', space=vmem, size = 0x200, scoped, tag = 'scratch operand']
  #allocation3 [shape = 'f32[1,16]{1,0:T(1,128)}', space=vmem, size = 0x200, scoped, tag = 'scratch operand']
  %s0 = inlined_call_operand.vmem [shape: bf16[128,36], index: 0, kind: input, shape index: {}]
  %s1 = inlined_call_operand.vmem [shape: bf16[36,16], index: 1, kind: input, shape index: {}]
  %s2 = inlined_call_operand.vmem [shape: f32[128,16], index: 2, kind: output, shape index: {0}]
  %s3 = inlined_call_operand.vmem [shape: f32[1,16], index: 3, kind: output, shape index: {1}]
  %s4 = inlined_call_operand.vmem [shape: f32[1,16], index: 4, kind: output, shape index: {2}]
  %5 = xla_tuple %s2, %s3, %s4
  %s6 = sld [smem:[#allocation0]]
  $region65: #{res_block_forward.4} parent=0
    _
  %s8 = ssub.s32 1, %s6
  %s9 = scalar_select 0, %s8, %s6
  loop: start=0, step=1, limit=4
  $region2: #{res_block_forward.4} parent=0 // loop_pre_header
    _
  $region3: #{res_block_forward.4} parent=0 // loop_header
    %s11 = sphi 0, %s15
    %p12 = scmp.ge.s32.totalorder %s11, 4
    %s21 = sphi 0, %s23
    %s24 = sphi 0, %s21
    %s25 = sphi 0, %s24
    %s41 = sphi 0, %s25
    %s45 = sphi 0, %s45
    %s47 = sphi 0, %s45
    %s48 = sphi 0, %s47
    %s62 = sphi 0, %s48
    %s68 = sphi 0, %s70
    %s71 = sphi 0, %s68
    %s72 = sphi 0, %s71
    %s88 = sphi 0, %s72
    %s92 = sphi 0, %s92
    %s94 = sphi 0, %s92
    %s95 = sphi 0, %s94
    %s109 = sphi 0, %s95
    %s113 = sphi 0, %s113
    %s115 = sphi 0, %s113
    %s116 = sphi 0, %s115
    %s130 = sphi 0, %s116
  $region4: #{res_block_forward.4} parent=0 // loop_header_branch
    %14 = sbr.rel (%p12) target = $region8
  $region5: #{res_block_forward.4} parent=0 // loop_body
    %s16 = ssub.s32 %s11, 1
    %s17 = ssub.s32 %s11, 2
    %s18 = sadd.s32 %s11, 1
    %s19 = ssub.s32 %s11, %s18
    %p20 = scmp.eq.s32.totalorder %s19, 0
    %s22 = sadd.s32 %s21, 1
    %s23 = scalar_select %p20, %s21, %s22
    %p26 = pneg %p20
    %p27 = scmp.eq.s32.totalorder %s11, 1
    %p28 = por %p26, %p27
    %p29 = scmp.ne.s32.totalorder %s21, %s24
    %p30 = scmp.eq.s32.totalorder %s11, 0
    %p31 = por %p29, %p30
    %p32 = scmp.ne.s32.totalorder %s21, %s24
    %p33 = scmp.eq.s32.totalorder %s16, 1
    %p34 = por %p32, %p33
    %p35 = scmp.ne.s32.totalorder %s24, %s25
    %p36 = scmp.eq.s32.totalorder %s16, 0
    %p37 = por %p35, %p36
    %p38 = scmp.ne.s32.totalorder %s24, %s25
    %p39 = scmp.eq.s32.totalorder %s17, 1
    %p40 = por %p38, %p39
    %p42 = scmp.ne.s32.totalorder %s25, %s41
    %p43 = scmp.eq.s32.totalorder %s17, 0
    %p44 = por %p42, %p43
    %s46 = sadd.s32 %s45, 1
    %p49 = scmp.eq.s32.totalorder %s11, 1
    %p50 = scmp.ne.s32.totalorder %s45, %s47
    %p51 = scmp.eq.s32.totalorder %s11, 0
    %p52 = por %p50, %p51
    %p53 = scmp.ne.s32.totalorder %s45, %s47
    %p54 = scmp.eq.s32.totalorder %s16, 1
    %p55 = por %p53, %p54
    %p56 = scmp.ne.s32.totalorder %s47, %s48
    %p57 = scmp.eq.s32.totalorder %s16, 0
    %p58 = por %p56, %p57
    %p59 = scmp.ne.s32.totalorder %s47, %s48
    %p60 = scmp.eq.s32.totalorder %s17, 1
    %p61 = por %p59, %p60
    %p63 = scmp.ne.s32.totalorder %s48, %s62
    %p64 = scmp.eq.s32.totalorder %s17, 0
    %p65 = por %p63, %p64
    %s66 = ssub.s32 %s11, %s18
    %p67 = scmp.eq.s32.totalorder %s66, 0
    %s69 = sadd.s32 %s68, 1
    %s70 = scalar_select %p67, %s68, %s69
    %p73 = pneg %p67
    %p74 = scmp.eq.s32.totalorder %s11, 1
    %p75 = por %p73, %p74
    %p76 = scmp.ne.s32.totalorder %s68, %s71
    %p77 = scmp.eq.s32.totalorder %s11, 0
    %p78 = por %p76, %p77
    %p79 = scmp.ne.s32.totalorder %s68, %s71
    %p80 = scmp.eq.s32.totalorder %s16, 1
    %p81 = por %p79, %p80
    %p82 = scmp.ne.s32.totalorder %s71, %s72
    %p83 = scmp.eq.s32.totalorder %s16, 0
    %p84 = por %p82, %p83
    %p85 = scmp.ne.s32.totalorder %s71, %s72
    %p86 = scmp.eq.s32.totalorder %s17, 1
    %p87 = por %p85, %p86
    %p89 = scmp.ne.s32.totalorder %s72, %s88
    %p90 = scmp.eq.s32.totalorder %s17, 0
    %p91 = por %p89, %p90
    %s93 = sadd.s32 %s92, 1
    %p96 = scmp.eq.s32.totalorder %s11, 1
    %p97 = scmp.ne.s32.totalorder %s92, %s94
    %p98 = scmp.eq.s32.totalorder %s11, 0
    %p99 = por %p97, %p98
    %p100 = scmp.ne.s32.totalorder %s92, %s94
    %p101 = scmp.eq.s32.totalorder %s16, 1
    %p102 = por %p100, %p101
    %p103 = scmp.ne.s32.totalorder %s94, %s95
    %p104 = scmp.eq.s32.totalorder %s16, 0
    %p105 = por %p103, %p104
    %p106 = scmp.ne.s32.totalorder %s94, %s95
    %p107 = scmp.eq.s32.totalorder %s17, 1
    %p108 = por %p106, %p107
    %p110 = scmp.ne.s32.totalorder %s95, %s109
    %p111 = scmp.eq.s32.totalorder %s17, 0
    %p112 = por %p110, %p111
    %s114 = sadd.s32 %s113, 1
    %p117 = scmp.eq.s32.totalorder %s11, 1
    %p118 = scmp.ne.s32.totalorder %s113, %s115
    %p119 = scmp.eq.s32.totalorder %s11, 0
    %p120 = por %p118, %p119
    %p121 = scmp.ne.s32.totalorder %s113, %s115
    %p122 = scmp.eq.s32.totalorder %s16, 1
    %p123 = por %p121, %p122
    %p124 = scmp.ne.s32.totalorder %s115, %s116
    %p125 = scmp.eq.s32.totalorder %s16, 0
    %p126 = por %p124, %p125
    %p127 = scmp.ne.s32.totalorder %s115, %s116
    %p128 = scmp.eq.s32.totalorder %s17, 1
    %p129 = por %p127, %p128
    %p131 = scmp.ne.s32.totalorder %s116, %s130
    %p132 = scmp.eq.s32.totalorder %s17, 0
    %p133 = por %p131, %p132
    %p134 = scmp.le.s32.totalorder 1, %s11
    %p135 = scmp.lt.s32.totalorder %s11, 3
    %p136 = pnand %p134, %p135
    %p137 = pneg %p136
    // Predicated region
    $region9: #{res_block_forward.4} parent=5 // pred_check
      _
    $region10: #{res_block_forward.4} parent=5 // pred_check_branch
      %139 = sbr.rel (%p136) target = $region12
    $region11: #{res_block_forward.4} parent=5 // pred_region
      %s140 = ssub.s32 %s11, 1
      // Predicated region
      $region13: #{res_block_forward.4} parent=11 // pred_check
        %p141 = pneg %p58
      $region14: #{res_block_forward.4} parent=11 // pred_check_branch
        %143 = sbr.rel (%p141) target = $region16
      $region15: #{res_block_forward.4} parent=11 // pred_region
        _
      $region16: #{res_block_forward.4} parent=11 // pred_fallthru
        _
    $region12: #{res_block_forward.4} parent=5 // pred_fallthru
      _
    %p144 = scmp.lt.s32.totalorder %s11, 2
    // Predicated region
    $region17: #{res_block_forward.4} parent=5 // pred_check
      %p145 = pneg %p144
    $region18: #{res_block_forward.4} parent=5 // pred_check_branch
      %147 = sbr.rel (%p145) target = $region20
    $region19: #{res_block_forward.4} parent=5 // pred_region
      // Predicated region
      $region21: #{res_block_forward.4} parent=19 // pred_check
        %p148 = pneg %p31
      $region22: #{res_block_forward.4} parent=19 // pred_check_branch
        %150 = sbr.rel (%p148) target = $region24
      $region23: #{res_block_forward.4} parent=19 // pred_region
        %s151 = smul.u32 8, %s11
        %p152 = scmp.lt.s32.totalorder %s151, 15
        %s153 = scalar_select %p152, %s151, 15
        %s154 = smul.addr %s153, 4
        %s155 = scalar_lea.vmem %s0, %s154
        %s156 = smul.u32 8, %s11
      $region24: #{res_block_forward.4} parent=19 // pred_fallthru
        _
    $region20: #{res_block_forward.4} parent=5 // pred_fallthru
      _
    %p157 = scmp.le.s32.totalorder 1, %s11
    %p158 = scmp.lt.s32.totalorder %s11, 3
    %p159 = pnand %p157, %p158
    %p160 = pneg %p159
    // Predicated region
    $region25: #{res_block_forward.4} parent=5 // pred_check
      _
    $region26: #{res_block_forward.4} parent=5 // pred_check_branch
      %162 = sbr.rel (%p159) target = $region28
    $region27: #{res_block_forward.4} parent=5 // pred_region
      %s163 = ssub.s32 %s11, 1
      %s164 = smul.u32 8, %s16
      %p165 = scmp.lt.s32.totalorder %s164, 15
      %s166 = scalar_select %p165, %s164, 15
      %s167 = smul.addr %s166, 4
      %s168 = scalar_lea.vmem %s0, %s167
      %p169 = pneg %p37
      %p170 = pneg %p34
      %p171 = pneg %p58
      %p172 = pneg %p55
      %p173 = pneg %p84
      %p174 = pneg %p81
      %s175 = smul.u32 8, %s16
      %p176 = scmp.lt.s32.totalorder %s175, 15
      %s177 = scalar_select %p176, %s175, 15
      %s178 = smul.addr %s177, 8
      %s179 = scalar_lea.vmem %s2, %s178
      %p180 = pneg %p105
      %p181 = pneg %p102
      %p182 = pneg %p126
      %p183 = pneg %p123
      %s184 = smul.u32 8, %s16
      %p185 = scmp.lt.s32.totalorder %s184, 15
      %s186 = scalar_select %p185, %s184, 15
      %s187 = smul.addr %s186, 4
      %s188 = scalar_lea.vmem %s0, %s187
      %s189 = smul.u32 8, %s16
      %s190 = smul.u32 8, %s16
      %p191 = scmp.lt.s32.totalorder %s190, 15
      %s192 = scalar_select %p191, %s190, 15
      %s193 = smul.addr %s192, 8
      %s194 = scalar_lea.vmem %s2, %s193
      %s195 = smul.u32 8, %s16
      %p197 = scmp.eq.s32.totalorder %s16, 0
      // Predicated region
      $region29: #{res_block_forward.4} parent=27 // pred_check
        %p198 = pneg %p197
      $region30: #{res_block_forward.4} parent=27 // pred_check_branch
        %200 = sbr.rel (%p198) target = $region32
      $region31: #{res_block_forward.4} parent=27 // pred_region
        %vm201 = vcmask 122880
        %202 = vst.msk [vmem:[#allocation2] sm:$0x1] %vm201, 0.0
        %203 = vst.msk [vmem:[#allocation3] sm:$0x1] %vm201, 0.0
      $region32: #{res_block_forward.4} parent=27 // pred_fallthru
        _
      %v204 = vld [vmem:[%s188] sm:$0xf]
      %v205 = vld [vmem:[%s188 + $0x4] sm:$0xf]
      %v206 = vld [vmem:[%s188 + $0x8] sm:$0xf]
      %v207 = vld [vmem:[%s188 + $0xc] sm:$0xf]
      %v208 = vld [vmem:[%s188 + $0x10] sm:$0xf]
      %v209 = vld [vmem:[%s188 + $0x14] sm:$0xf]
      %v210 = vld [vmem:[%s188 + $0x18] sm:$0xf]
      %v211 = vld [vmem:[%s188 + $0x1c] sm:$0xf]
      %v212 = vld [vmem:[%s1] sm:$0xf]
      %v213 = vld [vmem:[%s1 + $0x4] sm:$0xf]
      %v214 = vld [vmem:[%s1 + $0x8] sm:$0xf]
      %v215 = vld [vmem:[%s1 + $0xc] sm:$0xf]
      %v216 = vld [vmem:[%s1 + $0x10] sm:$0x3]
      %v225 = vunpack.c.l.b16 %v204
      %v226 = vunpack.c.l.b16 %v205
      %v227 = vunpack.c.l.b16 %v206
      %v228 = vunpack.c.l.b16 %v207
      %v229 = vunpack.c.l.b16 %v208
      %v230 = vunpack.c.l.b16 %v209
      %v231 = vunpack.c.l.b16 %v210
      %v232 = vunpack.c.l.b16 %v211
      %v233 = vpack.c.b16 %v226, %v225
      %v234 = vpack.c.b16 %v228, %v227
      %v235 = vpack.c.b16 %v230, %v229
      %v236 = vpack.c.b16 %v232, %v231
      %v242 = vunpack.c.l.b16 %v212
      %v243 = vunpack.c.l.b16 %v213
      %v244 = vunpack.c.l.b16 %v214
      %v245 = vunpack.c.l.b16 %v215
      %v246 = vunpack.c.l.b16 %v216
      %v247 = vpack.c.b16 %v243, %v242
      %v248 = vpack.c.b16 %v245, %v244
      %v249 = vpack.c.b16 %v246, %v246
      %vm252 = vcmask 293888
      %v254 = vsel %vm252, %v233, 0
      %v257 = vsel %vm252, %v234, 0
      %v260 = vsel %vm252, %v235, 0
      %v263 = vsel %vm252, %v236, 0
      %vm265 = vcmask 1041408
      %v267 = vsel %vm265, %v249, 0
      %269 = vmatpush.bf16.msra.mxu0 0
      %270 = vmatpush.bf16.msra.mxu0 0
      %271 = vmatpush.bf16.msra.mxu0 0
      %272 = vmatpush.bf16.msra.mxu0 0
      %273 = vmatpush.bf16.msra.mxu0 0
      %274 = vmatpush.bf16.msra.mxu0 %v267
      %275 = vmatpush.bf16.msra.mxu0 %v248
      %276 = vmatpush.bf16.msra.mxu0 %v247
      %277 = vmatmul.bf16.gmra.mxu0 %v254
      %v278 = vpop.f32.mrf.mxu0
      %v279 = vadd.f32 0.0, %v278
      %v280 = vpop.f32.mrf.mxu0
      %v281 = vadd.f32 0.0, %v280
      %282 = vmatmul.bf16.gmra.mxu0 %v257
      %v283 = vpop.f32.mrf.mxu0
      %v284 = vadd.f32 0.0, %v283
      %v285 = vpop.f32.mrf.mxu0
      %v286 = vadd.f32 0.0, %v285
      %287 = vmatmul.bf16.gmra.mxu0 %v260
      %v288 = vpop.f32.mrf.mxu0
      %v289 = vadd.f32 0.0, %v288
      %v290 = vpop.f32.mrf.mxu0
      %v291 = vadd.f32 0.0, %v290
      %292 = vmatmul.bf16.gmra.mxu0 %v263
      %v293 = vpop.f32.mrf.mxu0
      %v294 = vadd.f32 0.0, %v293
      %v295 = vpop.f32.mrf.mxu0
      %v296 = vadd.f32 0.0, %v295
      %297 = vdwg.mxu0
      %vm298 = vcmask 130048
      %299 = vst.msk [vmem:[%s194] sm:$0xff] %vm298, %v279
      %300 = vst.msk [vmem:[%s194 + $0x8] sm:$0xff] %vm298, %v281
      %301 = vst.msk [vmem:[%s194 + $0x10] sm:$0xff] %vm298, %v284
      %302 = vst.msk [vmem:[%s194 + $0x18] sm:$0xff] %vm298, %v286
      %303 = vst.msk [vmem:[%s194 + $0x20] sm:$0xff] %vm298, %v289
      %304 = vst.msk [vmem:[%s194 + $0x28] sm:$0xff] %vm298, %v291
      %305 = vst.msk [vmem:[%s194 + $0x30] sm:$0xff] %vm298, %v294
      %306 = vst.msk [vmem:[%s194 + $0x38] sm:$0xff] %vm298, %v296
      %v307 = vld [vmem:[#allocation2] sm:$0x1]
      %v308 = vsel %vm298, %v279, 0.0
      %v309 = vsel %vm298, %v281, 0.0
      %v310 = vadd.f32 %v308, %v309
      %v311 = vsel %vm298, %v284, 0.0
      %v312 = vadd.f32 %v310, %v311
      %v313 = vsel %vm298, %v286, 0.0
      %v314 = vadd.f32 %v312, %v313
      %v315 = vsel %vm298, %v289, 0.0
      %v316 = vadd.f32 %v314, %v315
      %v317 = vsel %vm298, %v291, 0.0
      %v318 = vadd.f32 %v316, %v317
      %v319 = vsel %vm298, %v294, 0.0
      %v320 = vadd.f32 %v318, %v319
      %v321 = vsel %vm298, %v296, 0.0
      %v322 = vadd.f32 %v320, %v321
      %v323 = vrot.slane %v322, 4
      %v324 = vadd.f32 %v322, %v323
      %v325 = vrot.slane %v324, 2
      %v326 = vadd.f32 %v324, %v325
      %v327 = vrot.slane %v326, 1
      %v328 = vadd.f32 %v326, %v327
      %v329 = vadd.f32 %v307, %v328
      %vm330 = vcmask 122880
      %331 = vst.msk [vmem:[#allocation2] sm:$0x1] %vm330, %v329
      %v332 = vld [vmem:[#allocation3] sm:$0x1]
      %v333 = vmul.f32 %v279, %v279
      %v334 = vmul.f32 %v281, %v281
      %v335 = vmul.f32 %v284, %v284
      %v336 = vmul.f32 %v286, %v286
      %v337 = vmul.f32 %v289, %v289
      %v338 = vmul.f32 %v291, %v291
      %v339 = vmul.f32 %v294, %v294
      %v340 = vmul.f32 %v296, %v296
      %v341 = vsel %vm298, %v333, 0.0
      %v342 = vsel %vm298, %v334, 0.0
      %v343 = vadd.f32 %v341, %v342
      %v344 = vsel %vm298, %v335, 0.0
      %v345 = vadd.f32 %v343, %v344
      %v346 = vsel %vm298, %v336, 0.0
      %v347 = vadd.f32 %v345, %v346
      %v348 = vsel %vm298, %v337, 0.0
      %v349 = vadd.f32 %v347, %v348
      %v350 = vsel %vm298, %v338, 0.0
      %v351 = vadd.f32 %v349, %v350
      %v352 = vsel %vm298, %v339, 0.0
      %v353 = vadd.f32 %v351, %v352
      %v354 = vsel %vm298, %v340, 0.0
      %v355 = vadd.f32 %v353, %v354
      %v356 = vrot.slane %v355, 4
      %v357 = vadd.f32 %v355, %v356
      %v358 = vrot.slane %v357, 2
      %v359 = vadd.f32 %v357, %v358
      %v360 = vrot.slane %v359, 1
      %v361 = vadd.f32 %v359, %v360
      %v362 = vadd.f32 %v332, %v361
      %363 = vst.msk [vmem:[#allocation3] sm:$0x1] %vm330, %v362
      %p364 = scmp.eq.s32.totalorder %s16, 1
      // Predicated region
      $region33: #{res_block_forward.4} parent=27 // pred_check
        %p365 = pneg %p364
      $region34: #{res_block_forward.4} parent=27 // pred_check_branch
        %367 = sbr.rel (%p365) target = $region36
      $region35: #{res_block_forward.4} parent=27 // pred_region
        %v368 = vld [vmem:[#allocation2] sm:$0x1]
        %369 = vst.msk [vmem:[%s3] sm:$0x1] %vm330, %v368
        %v370 = vld [vmem:[#allocation3] sm:$0x1]
        %371 = vst.msk [vmem:[%s4] sm:$0x1] %vm330, %v370
      $region36: #{res_block_forward.4} parent=27 // pred_fallthru
        _
      %s372 = smul.u32 8, %s16
      %p373 = scmp.lt.s32.totalorder %s372, 15
      %s374 = scalar_select %p373, %s372, 15
      %s375 = smul.addr %s374, 8
      %s376 = scalar_lea.vmem %s2, %s375
      // Predicated region
      $region37: #{res_block_forward.4} parent=27 // pred_check
        %p377 = pneg %p81
      $region38: #{res_block_forward.4} parent=27 // pred_check_branch
        %379 = sbr.rel (%p377) target = $region40
      $region39: #{res_block_forward.4} parent=27 // pred_region
        %s380 = smul.u32 8, %s16
      $region40: #{res_block_forward.4} parent=27 // pred_fallthru
        _
      // Predicated region
      $region41: #{res_block_forward.4} parent=27 // pred_check
        %p381 = pneg %p102
      $region42: #{res_block_forward.4} parent=27 // pred_check_branch
        %383 = sbr.rel (%p381) target = $region44
      $region43: #{res_block_forward.4} parent=27 // pred_region
        _
      $region44: #{res_block_forward.4} parent=27 // pred_fallthru
        _
      // Predicated region
      $region45: #{res_block_forward.4} parent=27 // pred_check
        %p384 = pneg %p123
      $region46: #{res_block_forward.4} parent=27 // pred_check_branch
        %386 = sbr.rel (%p384) target = $region48
      $region47: #{res_block_forward.4} parent=27 // pred_region
        _
      $region48: #{res_block_forward.4} parent=27 // pred_fallthru
        _
      // Predicated region
      $region49: #{res_block_forward.4} parent=27 // pred_check
        %p387 = pneg %p102
      $region50: #{res_block_forward.4} parent=27 // pred_check_branch
        %389 = sbr.rel (%p387) target = $region52
      $region51: #{res_block_forward.4} parent=27 // pred_region
        _
      $region52: #{res_block_forward.4} parent=27 // pred_fallthru
        _
      // Predicated region
      $region53: #{res_block_forward.4} parent=27 // pred_check
        %p390 = pneg %p123
      $region54: #{res_block_forward.4} parent=27 // pred_check_branch
        %392 = sbr.rel (%p390) target = $region56
      $region55: #{res_block_forward.4} parent=27 // pred_region
        _
      $region56: #{res_block_forward.4} parent=27 // pred_fallthru
        _
    $region28: #{res_block_forward.4} parent=5 // pred_fallthru
      _
    %p393 = scmp.le.s32.totalorder 2, %s11
    // Predicated region
    $region57: #{res_block_forward.4} parent=5 // pred_check
      %p394 = pneg %p393
    $region58: #{res_block_forward.4} parent=5 // pred_check_branch
      %396 = sbr.rel (%p394) target = $region60
    $region59: #{res_block_forward.4} parent=5 // pred_region
      %s397 = ssub.s32 %s11, 2
      // Predicated region
      $region61: #{res_block_forward.4} parent=59 // pred_check
        %p398 = pneg %p87
      $region62: #{res_block_forward.4} parent=59 // pred_check_branch
        %400 = sbr.rel (%p398) target = $region64
      $region63: #{res_block_forward.4} parent=59 // pred_region
        %s401 = smul.u32 8, %s17
        %p402 = scmp.lt.s32.totalorder %s401, 15
        %s403 = scalar_select %p402, %s401, 15
        %s404 = smul.addr %s403, 8
        %s405 = scalar_lea.vmem %s2, %s404
      $region64: #{res_block_forward.4} parent=59 // pred_fallthru
        _
    $region60: #{res_block_forward.4} parent=5 // pred_fallthru
      _
  $region6: #{res_block_forward.4} parent=0 // loop_footer
    %s15 = sadd.s32 1, %s11
  $region7: #{res_block_forward.4} parent=0 // loop_footer_branch
    %10 = sbr.rel target = $region3
  $region8: #{res_block_forward.4} parent=0 // loop_exit
    _

// kernel: res_block_forward.6
$region0: #{res_block_forward.6}
  #allocation0 [shape = 'u32[]', space=smem, size = 0x4, offset = 0x4, fixed_abs, tag = 'smem constant byte address 0x4 - core index']
  #allocation1 [shape = 'u32[72,128]{1,0:T(1,128)}', space=vmem, size = 0x9000, scoped, tag = 'internal scratch']
  #allocation2 [shape = 'f32[1,8]{1,0:T(1,128)}', space=vmem, size = 0x200, scoped, tag = 'scratch operand']
  #allocation3 [shape = 'f32[1,8]{1,0:T(1,128)}', space=vmem, size = 0x200, scoped, tag = 'scratch operand']
  %s0 = inlined_call_operand.vmem [shape: bf16[128,72], index: 0, kind: input, shape index: {}]
  %s1 = inlined_call_operand.vmem [shape: bf16[72,8], index: 1, kind: input, shape index: {}]
  %s2 = inlined_call_operand.vmem [shape: f32[128,8], index: 2, kind: output, shape index: {0}]
  %s3 = inlined_call_operand.vmem [shape: f32[1,8], index: 3, kind: output, shape index: {1}]
  %s4 = inlined_call_operand.vmem [shape: f32[1,8], index: 4, kind: output, shape index: {2}]
  %5 = xla_tuple %s2, %s3, %s4
  %s6 = sld [smem:[#allocation0]]
  $region65: #{res_block_forward.6} parent=0
    _
  %s8 = ssub.s32 1, %s6
  %s9 = scalar_select 0, %s8, %s6
  loop: start=0, step=1, limit=4
  $region2: #{res_block_forward.6} parent=0 // loop_pre_header
    _
  $region3: #{res_block_forward.6} parent=0 // loop_header
    %s11 = sphi 0, %s15
    %p12 = scmp.ge.s32.totalorder %s11, 4
    %s21 = sphi 0, %s23
    %s24 = sphi 0, %s21
    %s25 = sphi 0, %s24
    %s41 = sphi 0, %s25
    %s45 = sphi 0, %s45
    %s47 = sphi 0, %s45
    %s48 = sphi 0, %s47
    %s62 = sphi 0, %s48
    %s68 = sphi 0, %s70
    %s71 = sphi 0, %s68
    %s72 = sphi 0, %s71
    %s88 = sphi 0, %s72
    %s92 = sphi 0, %s92
    %s94 = sphi 0, %s92
    %s95 = sphi 0, %s94
    %s109 = sphi 0, %s95
    %s113 = sphi 0, %s113
    %s115 = sphi 0, %s113
    %s116 = sphi 0, %s115
    %s130 = sphi 0, %s116
  $region4: #{res_block_forward.6} parent=0 // loop_header_branch
    %14 = sbr.rel (%p12) target = $region8
  $region5: #{res_block_forward.6} parent=0 // loop_body
    %s16 = ssub.s32 %s11, 1
    %s17 = ssub.s32 %s11, 2
    %s18 = sadd.s32 %s11, 1
    %s19 = ssub.s32 %s11, %s18
    %p20 = scmp.eq.s32.totalorder %s19, 0
    %s22 = sadd.s32 %s21, 1
    %s23 = scalar_select %p20, %s21, %s22
    %p26 = pneg %p20
    %p27 = scmp.eq.s32.totalorder %s11, 1
    %p28 = por %p26, %p27
    %p29 = scmp.ne.s32.totalorder %s21, %s24
    %p30 = scmp.eq.s32.totalorder %s11, 0
    %p31 = por %p29, %p30
    %p32 = scmp.ne.s32.totalorder %s21, %s24
    %p33 = scmp.eq.s32.totalorder %s16, 1
    %p34 = por %p32, %p33
    %p35 = scmp.ne.s32.totalorder %s24, %s25
    %p36 = scmp.eq.s32.totalorder %s16, 0
    %p37 = por %p35, %p36
    %p38 = scmp.ne.s32.totalorder %s24, %s25
    %p39 = scmp.eq.s32.totalorder %s17, 1
    %p40 = por %p38, %p39
    %p42 = scmp.ne.s32.totalorder %s25, %s41
    %p43 = scmp.eq.s32.totalorder %s17, 0
    %p44 = por %p42, %p43
    %s46 = sadd.s32 %s45, 1
    %p49 = scmp.eq.s32.totalorder %s11, 1
    %p50 = scmp.ne.s32.totalorder %s45, %s47
    %p51 = scmp.eq.s32.totalorder %s11, 0
    %p52 = por %p50, %p51
    %p53 = scmp.ne.s32.totalorder %s45, %s47
    %p54 = scmp.eq.s32.totalorder %s16, 1
    %p55 = por %p53, %p54
    %p56 = scmp.ne.s32.totalorder %s47, %s48
    %p57 = scmp.eq.s32.totalorder %s16, 0
    %p58 = por %p56, %p57
    %p59 = scmp.ne.s32.totalorder %s47, %s48
    %p60 = scmp.eq.s32.totalorder %s17, 1
    %p61 = por %p59, %p60
    %p63 = scmp.ne.s32.totalorder %s48, %s62
    %p64 = scmp.eq.s32.totalorder %s17, 0
    %p65 = por %p63, %p64
    %s66 = ssub.s32 %s11, %s18
    %p67 = scmp.eq.s32.totalorder %s66, 0
    %s69 = sadd.s32 %s68, 1
    %s70 = scalar_select %p67, %s68, %s69
    %p73 = pneg %p67
    %p74 = scmp.eq.s32.totalorder %s11, 1
    %p75 = por %p73, %p74
    %p76 = scmp.ne.s32.totalorder %s68, %s71
    %p77 = scmp.eq.s32.totalorder %s11, 0
    %p78 = por %p76, %p77
    %p79 = scmp.ne.s32.totalorder %s68, %s71
    %p80 = scmp.eq.s32.totalorder %s16, 1
    %p81 = por %p79, %p80
    %p82 = scmp.ne.s32.totalorder %s71, %s72
    %p83 = scmp.eq.s32.totalorder %s16, 0
    %p84 = por %p82, %p83
    %p85 = scmp.ne.s32.totalorder %s71, %s72
    %p86 = scmp.eq.s32.totalorder %s17, 1
    %p87 = por %p85, %p86
    %p89 = scmp.ne.s32.totalorder %s72, %s88
    %p90 = scmp.eq.s32.totalorder %s17, 0
    %p91 = por %p89, %p90
    %s93 = sadd.s32 %s92, 1
    %p96 = scmp.eq.s32.totalorder %s11, 1
    %p97 = scmp.ne.s32.totalorder %s92, %s94
    %p98 = scmp.eq.s32.totalorder %s11, 0
    %p99 = por %p97, %p98
    %p100 = scmp.ne.s32.totalorder %s92, %s94
    %p101 = scmp.eq.s32.totalorder %s16, 1
    %p102 = por %p100, %p101
    %p103 = scmp.ne.s32.totalorder %s94, %s95
    %p104 = scmp.eq.s32.totalorder %s16, 0
    %p105 = por %p103, %p104
    %p106 = scmp.ne.s32.totalorder %s94, %s95
    %p107 = scmp.eq.s32.totalorder %s17, 1
    %p108 = por %p106, %p107
    %p110 = scmp.ne.s32.totalorder %s95, %s109
    %p111 = scmp.eq.s32.totalorder %s17, 0
    %p112 = por %p110, %p111
    %s114 = sadd.s32 %s113, 1
    %p117 = scmp.eq.s32.totalorder %s11, 1
    %p118 = scmp.ne.s32.totalorder %s113, %s115
    %p119 = scmp.eq.s32.totalorder %s11, 0
    %p120 = por %p118, %p119
    %p121 = scmp.ne.s32.totalorder %s113, %s115
    %p122 = scmp.eq.s32.totalorder %s16, 1
    %p123 = por %p121, %p122
    %p124 = scmp.ne.s32.totalorder %s115, %s116
    %p125 = scmp.eq.s32.totalorder %s16, 0
    %p126 = por %p124, %p125
    %p127 = scmp.ne.s32.totalorder %s115, %s116
    %p128 = scmp.eq.s32.totalorder %s17, 1
    %p129 = por %p127, %p128
    %p131 = scmp.ne.s32.totalorder %s116, %s130
    %p132 = scmp.eq.s32.totalorder %s17, 0
    %p133 = por %p131, %p132
    %p134 = scmp.le.s32.totalorder 1, %s11
    %p135 = scmp.lt.s32.totalorder %s11, 3
    %p136 = pnand %p134, %p135
    %p137 = pneg %p136
    // Predicated region
    $region9: #{res_block_forward.6} parent=5 // pred_check
      _
    $region10: #{res_block_forward.6} parent=5 // pred_check_branch
      %139 = sbr.rel (%p136) target = $region12
    $region11: #{res_block_forward.6} parent=5 // pred_region
      %s140 = ssub.s32 %s11, 1
      // Predicated region
      $region13: #{res_block_forward.6} parent=11 // pred_check
        %p141 = pneg %p58
      $region14: #{res_block_forward.6} parent=11 // pred_check_branch
        %143 = sbr.rel (%p141) target = $region16
      $region15: #{res_block_forward.6} parent=11 // pred_region
        _
      $region16: #{res_block_forward.6} parent=11 // pred_fallthru
        _
    $region12: #{res_block_forward.6} parent=5 // pred_fallthru
      _
    %p144 = scmp.lt.s32.totalorder %s11, 2
    // Predicated region
    $region17: #{res_block_forward.6} parent=5 // pred_check
      %p145 = pneg %p144
    $region18: #{res_block_forward.6} parent=5 // pred_check_branch
      %147 = sbr.rel (%p145) target = $region20
    $region19: #{res_block_forward.6} parent=5 // pred_region
      // Predicated region
      $region21: #{res_block_forward.6} parent=19 // pred_check
        %p148 = pneg %p31
      $region22: #{res_block_forward.6} parent=19 // pred_check_branch
        %150 = sbr.rel (%p148) target = $region24
      $region23: #{res_block_forward.6} parent=19 // pred_region
        %s151 = smul.u32 8, %s11
        %p152 = scmp.lt.s32.totalorder %s151, 15
        %s153 = scalar_select %p152, %s151, 15
        %s154 = smul.addr %s153, 4
        %s155 = scalar_lea.vmem %s0, %s154
        %s156 = smul.u32 8, %s11
      $region24: #{res_block_forward.6} parent=19 // pred_fallthru
        _
    $region20: #{res_block_forward.6} parent=5 // pred_fallthru
      _
    %p157 = scmp.le.s32.totalorder 1, %s11
    %p158 = scmp.lt.s32.totalorder %s11, 3
    %p159 = pnand %p157, %p158
    %p160 = pneg %p159
    // Predicated region
    $region25: #{res_block_forward.6} parent=5 // pred_check
      _
    $region26: #{res_block_forward.6} parent=5 // pred_check_branch
      %162 = sbr.rel (%p159) target = $region28
    $region27: #{res_block_forward.6} parent=5 // pred_region
      %s163 = ssub.s32 %s11, 1
      %s164 = smul.u32 8, %s16
      %p165 = scmp.lt.s32.totalorder %s164, 15
      %s166 = scalar_select %p165, %s164, 15
      %s167 = smul.addr %s166, 4
      %s168 = scalar_lea.vmem %s0, %s167
      %p169 = pneg %p37
      %p170 = pneg %p34
      %p171 = pneg %p58
      %p172 = pneg %p55
      %p173 = pneg %p84
      %p174 = pneg %p81
      %s175 = smul.u32 8, %s16
      %p176 = scmp.lt.s32.totalorder %s175, 15
      %s177 = scalar_select %p176, %s175, 15
      %s178 = smul.addr %s177, 8
      %s179 = scalar_lea.vmem %s2, %s178
      %p180 = pneg %p105
      %p181 = pneg %p102
      %p182 = pneg %p126
      %p183 = pneg %p123
      %s184 = smul.u32 8, %s16
      %p185 = scmp.lt.s32.totalorder %s184, 15
      %s186 = scalar_select %p185, %s184, 15
      %s187 = smul.addr %s186, 4
      %s188 = scalar_lea.vmem %s0, %s187
      %s189 = smul.u32 8, %s16
      %s190 = smul.u32 8, %s16
      %p191 = scmp.lt.s32.totalorder %s190, 15
      %s192 = scalar_select %p191, %s190, 15
      %s193 = smul.addr %s192, 8
      %s194 = scalar_lea.vmem %s2, %s193
      %s195 = smul.u32 8, %s16
      %p197 = scmp.eq.s32.totalorder %s16, 0
      // Predicated region
      $region29: #{res_block_forward.6} parent=27 // pred_check
        %p198 = pneg %p197
      $region30: #{res_block_forward.6} parent=27 // pred_check_branch
        %200 = sbr.rel (%p198) target = $region32
      $region31: #{res_block_forward.6} parent=27 // pred_region
        %vm201 = vcmask 57344
        %202 = vst.msk [vmem:[#allocation2] sm:$0x1] %vm201, 0.0
        %203 = vst.msk [vmem:[#allocation3] sm:$0x1] %vm201, 0.0
      $region32: #{res_block_forward.6} parent=27 // pred_fallthru
        _
      %v204 = vld [vmem:[%s188] sm:$0xf]
      %v205 = vld [vmem:[%s188 + $0x4] sm:$0xf]
      %v206 = vld [vmem:[%s188 + $0x8] sm:$0xf]
      %v207 = vld [vmem:[%s188 + $0xc] sm:$0xf]
      %v208 = vld [vmem:[%s188 + $0x10] sm:$0xf]
      %v209 = vld [vmem:[%s188 + $0x14] sm:$0xf]
      %v210 = vld [vmem:[%s188 + $0x18] sm:$0xf]
      %v211 = vld [vmem:[%s188 + $0x1c] sm:$0xf]
      %v212 = vld [vmem:[%s1] sm:$0xf]
      %v213 = vld [vmem:[%s1 + $0x4] sm:$0xf]
      %v214 = vld [vmem:[%s1 + $0x8] sm:$0xf]
      %v215 = vld [vmem:[%s1 + $0xc] sm:$0xf]
      %v216 = vld [vmem:[%s1 + $0x10] sm:$0xf]
      %v217 = vld [vmem:[%s1 + $0x14] sm:$0xf]
      %v218 = vld [vmem:[%s1 + $0x18] sm:$0xf]
      %v219 = vld [vmem:[%s1 + $0x1c] sm:$0xf]
      %v220 = vld [vmem:[%s1 + $0x20] sm:$0xf]
      %v229 = vunpack.c.l.b16 %v204
      %v230 = vunpack.c.l.b16 %v205
      %v231 = vunpack.c.l.b16 %v206
      %v232 = vunpack.c.l.b16 %v207
      %v233 = vunpack.c.l.b16 %v208
      %v234 = vunpack.c.l.b16 %v209
      %v235 = vunpack.c.l.b16 %v210
      %v236 = vunpack.c.l.b16 %v211
      %v237 = vpack.c.b16 %v230, %v229
      %v238 = vpack.c.b16 %v232, %v231
      %v239 = vpack.c.b16 %v234, %v233
      %v240 = vpack.c.b16 %v236, %v235
      %v250 = vunpack.c.l.b16 %v212
      %v251 = vunpack.c.l.b16 %v213
      %v252 = vunpack.c.l.b16 %v214
      %v253 = vunpack.c.l.b16 %v215
      %v254 = vunpack.c.l.b16 %v216
      %v255 = vunpack.c.l.b16 %v217
      %v256 = vunpack.c.l.b16 %v218
      %v257 = vunpack.c.l.b16 %v219
      %v258 = vunpack.c.l.b16 %v220
      %v259 = vpack.c.b16 %v251, %v250
      %v260 = vpack.c.b16 %v253, %v252
      %v261 = vpack.c.b16 %v255, %v254
      %v262 = vpack.c.b16 %v257, %v256
      %v263 = vpack.c.b16 %v258, %v258
      %vm268 = vcmask 588800
      %v270 = vsel %vm268, %v237, 0
      %v273 = vsel %vm268, %v238, 0
      %v276 = vsel %vm268, %v239, 0
      %v279 = vsel %vm268, %v240, 0
      %vm281 = vcmask 1043456
      %v283 = vsel %vm281, %v263, 0
      %285 = vmatpush.bf16.msra.mxu0 0
      %286 = vmatpush.bf16.msra.mxu0 0
      %287 = vmatpush.bf16.msra.mxu0 0
      %288 = vmatpush.bf16.msra.mxu0 %v283
      %289 = vmatpush.bf16.msra.mxu0 %v262
      %290 = vmatpush.bf16.msra.mxu0 %v261
      %291 = vmatpush.bf16.msra.mxu0 %v260
      %292 = vmatpush.bf16.msra.mxu0 %v259
      %293 = vmatmul.bf16.gmra.mxu0 %v270
      %v294 = vpop.f32.mrf.mxu0
      %v295 = vadd.f32 0.0, %v294
      %v296 = vpop.f32.mrf.mxu0
      %v297 = vadd.f32 0.0, %v296
      %298 = vmatmul.bf16.gmra.mxu0 %v273
      %v299 = vpop.f32.mrf.mxu0
      %v300 = vadd.f32 0.0, %v299
      %v301 = vpop.f32.mrf.mxu0
      %v302 = vadd.f32 0.0, %v301
      %303 = vmatmul.bf16.gmra.mxu0 %v276
      %v304 = vpop.f32.mrf.mxu0
      %v305 = vadd.f32 0.0, %v304
      %v306 = vpop.f32.mrf.mxu0
      %v307 = vadd.f32 0.0, %v306
      %308 = vmatmul.bf16.gmra.mxu0 %v279
      %v309 = vpop.f32.mrf.mxu0
      %v310 = vadd.f32 0.0, %v309
      %v311 = vpop.f32.mrf.mxu0
      %v312 = vadd.f32 0.0, %v311
      %313 = vdwg.mxu0
      %vm314 = vcmask 64512
      %315 = vst.msk [vmem:[%s194] sm:$0xff] %vm314, %v295
      %316 = vst.msk [vmem:[%s194 + $0x8] sm:$0xff] %vm314, %v297
      %317 = vst.msk [vmem:[%s194 + $0x10] sm:$0xff] %vm314, %v300
      %318 = vst.msk [vmem:[%s194 + $0x18] sm:$0xff] %vm314, %v302
      %319 = vst.msk [vmem:[%s194 + $0x20] sm:$0xff] %vm314, %v305
      %320 = vst.msk [vmem:[%s194 + $0x28] sm:$0xff] %vm314, %v307
      %321 = vst.msk [vmem:[%s194 + $0x30] sm:$0xff] %vm314, %v310
      %322 = vst.msk [vmem:[%s194 + $0x38] sm:$0xff] %vm314, %v312
      %v323 = vld [vmem:[#allocation2] sm:$0x1]
      %v324 = vsel %vm314, %v295, 0.0
      %v325 = vsel %vm314, %v297, 0.0
      %v326 = vadd.f32 %v324, %v325
      %v327 = vsel %vm314, %v300, 0.0
      %v328 = vadd.f32 %v326, %v327
      %v329 = vsel %vm314, %v302, 0.0
      %v330 = vadd.f32 %v328, %v329
      %v331 = vsel %vm314, %v305, 0.0
      %v332 = vadd.f32 %v330, %v331
      %v333 = vsel %vm314, %v307, 0.0
      %v334 = vadd.f32 %v332, %v333
      %v335 = vsel %vm314, %v310, 0.0
      %v336 = vadd.f32 %v334, %v335
      %v337 = vsel %vm314, %v312, 0.0
      %v338 = vadd.f32 %v336, %v337
      %v339 = vrot.slane %v338, 4
      %v340 = vadd.f32 %v338, %v339
      %v341 = vrot.slane %v340, 2
      %v342 = vadd.f32 %v340, %v341
      %v343 = vrot.slane %v342, 1
      %v344 = vadd.f32 %v342, %v343
      %v345 = vadd.f32 %v323, %v344
      %vm346 = vcmask 57344
      %347 = vst.msk [vmem:[#allocation2] sm:$0x1] %vm346, %v345
      %v348 = vld [vmem:[#allocation3] sm:$0x1]
      %v349 = vmul.f32 %v295, %v295
      %v350 = vmul.f32 %v297, %v297
      %v351 = vmul.f32 %v300, %v300
      %v352 = vmul.f32 %v302, %v302
      %v353 = vmul.f32 %v305, %v305
      %v354 = vmul.f32 %v307, %v307
      %v355 = vmul.f32 %v310, %v310
      %v356 = vmul.f32 %v312, %v312
      %v357 = vsel %vm314, %v349, 0.0
      %v358 = vsel %vm314, %v350, 0.0
      %v359 = vadd.f32 %v357, %v358
      %v360 = vsel %vm314, %v351, 0.0
      %v361 = vadd.f32 %v359, %v360
      %v362 = vsel %vm314, %v352, 0.0
      %v363 = vadd.f32 %v361, %v362
      %v364 = vsel %vm314, %v353, 0.0
      %v365 = vadd.f32 %v363, %v364
      %v366 = vsel %vm314, %v354, 0.0
      %v367 = vadd.f32 %v365, %v366
      %v368 = vsel %vm314, %v355, 0.0
      %v369 = vadd.f32 %v367, %v368
      %v370 = vsel %vm314, %v356, 0.0
      %v371 = vadd.f32 %v369, %v370
      %v372 = vrot.slane %v371, 4
      %v373 = vadd.f32 %v371, %v372
      %v374 = vrot.slane %v373, 2
      %v375 = vadd.f32 %v373, %v374
      %v376 = vrot.slane %v375, 1
      %v377 = vadd.f32 %v375, %v376
      %v378 = vadd.f32 %v348, %v377
      %379 = vst.msk [vmem:[#allocation3] sm:$0x1] %vm346, %v378
      %p380 = scmp.eq.s32.totalorder %s16, 1
      // Predicated region
      $region33: #{res_block_forward.6} parent=27 // pred_check
        %p381 = pneg %p380
      $region34: #{res_block_forward.6} parent=27 // pred_check_branch
        %383 = sbr.rel (%p381) target = $region36
      $region35: #{res_block_forward.6} parent=27 // pred_region
        %v384 = vld [vmem:[#allocation2] sm:$0x1]
        %385 = vst.msk [vmem:[%s3] sm:$0x1] %vm346, %v384
        %v386 = vld [vmem:[#allocation3] sm:$0x1]
        %387 = vst.msk [vmem:[%s4] sm:$0x1] %vm346, %v386
      $region36: #{res_block_forward.6} parent=27 // pred_fallthru
        _
      %s388 = smul.u32 8, %s16
      %p389 = scmp.lt.s32.totalorder %s388, 15
      %s390 = scalar_select %p389, %s388, 15
      %s391 = smul.addr %s390, 8
      %s392 = scalar_lea.vmem %s2, %s391
      // Predicated region
      $region37: #{res_block_forward.6} parent=27 // pred_check
        %p393 = pneg %p81
      $region38: #{res_block_forward.6} parent=27 // pred_check_branch
        %395 = sbr.rel (%p393) target = $region40
      $region39: #{res_block_forward.6} parent=27 // pred_region
        %s396 = smul.u32 8, %s16
      $region40: #{res_block_forward.6} parent=27 // pred_fallthru
        _
      // Predicated region
      $region41: #{res_block_forward.6} parent=27 // pred_check
        %p397 = pneg %p102
      $region42: #{res_block_forward.6} parent=27 // pred_check_branch
        %399 = sbr.rel (%p397) target = $region44
      $region43: #{res_block_forward.6} parent=27 // pred_region
        _
      $region44: #{res_block_forward.6} parent=27 // pred_fallthru
        _
      // Predicated region
      $region45: #{res_block_forward.6} parent=27 // pred_check
        %p400 = pneg %p123
      $region46: #{res_block_forward.6} parent=27 // pred_check_branch
        %402 = sbr.rel (%p400) target = $region48
      $region47: #{res_block_forward.6} parent=27 // pred_region
        _
      $region48: #{res_block_forward.6} parent=27 // pred_fallthru
        _
      // Predicated region
      $region49: #{res_block_forward.6} parent=27 // pred_check
        %p403 = pneg %p102
      $region50: #{res_block_forward.6} parent=27 // pred_check_branch
        %405 = sbr.rel (%p403) target = $region52
      $region51: #{res_block_forward.6} parent=27 // pred_region
        _
      $region52: #{res_block_forward.6} parent=27 // pred_fallthru
        _
      // Predicated region
      $region53: #{res_block_forward.6} parent=27 // pred_check
        %p406 = pneg %p123
      $region54: #{res_block_forward.6} parent=27 // pred_check_branch
        %408 = sbr.rel (%p406) target = $region56
      $region55: #{res_block_forward.6} parent=27 // pred_region
        _
      $region56: #{res_block_forward.6} parent=27 // pred_fallthru
        _
    $region28: #{res_block_forward.6} parent=5 // pred_fallthru
      _
    %p409 = scmp.le.s32.totalorder 2, %s11
    // Predicated region
    $region57: #{res_block_forward.6} parent=5 // pred_check
      %p410 = pneg %p409
    $region58: #{res_block_forward.6} parent=5 // pred_check_branch
      %412 = sbr.rel (%p410) target = $region60
    $region59: #{res_block_forward.6} parent=5 // pred_region
      %s413 = ssub.s32 %s11, 2
      // Predicated region
      $region61: #{res_block_forward.6} parent=59 // pred_check
        %p414 = pneg %p87
      $region62: #{res_block_forward.6} parent=59 // pred_check_branch
        %416 = sbr.rel (%p414) target = $region64
      $region63: #{res_block_forward.6} parent=59 // pred_region
        %s417 = smul.u32 8, %s17
        %p418 = scmp.lt.s32.totalorder %s417, 15
        %s419 = scalar_select %p418, %s417, 15
        %s420 = smul.addr %s419, 8
        %s421 = scalar_lea.vmem %s2, %s420
      $region64: #{res_block_forward.6} parent=59 // pred_fallthru
        _
    $region60: #{res_block_forward.6} parent=5 // pred_fallthru
      _
  $region6: #{res_block_forward.6} parent=0 // loop_footer
    %s15 = sadd.s32 1, %s11
  $region7: #{res_block_forward.6} parent=0 // loop_footer_branch
    %10 = sbr.rel target = $region3
  $region8: #{res_block_forward.6} parent=0 // loop_exit
    _

// kernel: res_block_forward.7
$region0: #{res_block_forward.7}
  #allocation0 [shape = 'u32[]', space=smem, size = 0x4, offset = 0x4, fixed_abs, tag = 'smem constant byte address 0x4 - core index']
  #allocation1 [shape = 'u32[72,128]{1,0:T(1,128)}', space=vmem, size = 0x9000, scoped, tag = 'internal scratch']
  %s0 = inlined_call_operand.vmem [shape: f32[128,8], index: 0, kind: input, shape index: {}]
  %s1 = inlined_call_operand.vmem [shape: f32[1,8], index: 1, kind: input, shape index: {}]
  %s2 = inlined_call_operand.vmem [shape: f32[1,8], index: 2, kind: input, shape index: {}]
  %s3 = inlined_call_operand.vmem [shape: f32[128,8], index: 3, kind: input, shape index: {}]
  %s4 = inlined_call_operand.vmem [shape: f32[128,8], index: 4, kind: output, shape index: {}]
  %s5 = sld [smem:[#allocation0]]
  $region49: #{res_block_forward.7} parent=0
    _
  %s7 = ssub.s32 1, %s5
  %s8 = scalar_select 0, %s7, %s5
  loop: start=0, step=1, limit=4
  $region2: #{res_block_forward.7} parent=0 // loop_pre_header
    _
  $region3: #{res_block_forward.7} parent=0 // loop_header
    %s10 = sphi 0, %s14
    %p11 = scmp.ge.s32.totalorder %s10, 4
    %s20 = sphi 0, %s22
    %s23 = sphi 0, %s20
    %s24 = sphi 0, %s23
    %s40 = sphi 0, %s24
    %s44 = sphi 0, %s44
    %s46 = sphi 0, %s44
    %s47 = sphi 0, %s46
    %s61 = sphi 0, %s47
    %s65 = sphi 0, %s65
    %s67 = sphi 0, %s65
    %s68 = sphi 0, %s67
    %s82 = sphi 0, %s68
    %s88 = sphi 0, %s90
    %s91 = sphi 0, %s88
    %s92 = sphi 0, %s91
    %s108 = sphi 0, %s92
    %s114 = sphi 0, %s116
    %s117 = sphi 0, %s114
    %s118 = sphi 0, %s117
    %s134 = sphi 0, %s118
  $region4: #{res_block_forward.7} parent=0 // loop_header_branch
    %13 = sbr.rel (%p11) target = $region8
  $region5: #{res_block_forward.7} parent=0 // loop_body
    %s15 = ssub.s32 %s10, 1
    %s16 = ssub.s32 %s10, 2
    %s17 = sadd.s32 %s10, 1
    %s18 = ssub.s32 %s10, %s17
    %p19 = scmp.eq.s32.totalorder %s18, 0
    %s21 = sadd.s32 %s20, 1
    %s22 = scalar_select %p19, %s20, %s21
    %p25 = pneg %p19
    %p26 = scmp.eq.s32.totalorder %s10, 1
    %p27 = por %p25, %p26
    %p28 = scmp.ne.s32.totalorder %s20, %s23
    %p29 = scmp.eq.s32.totalorder %s10, 0
    %p30 = por %p28, %p29
    %p31 = scmp.ne.s32.totalorder %s20, %s23
    %p32 = scmp.eq.s32.totalorder %s15, 1
    %p33 = por %p31, %p32
    %p34 = scmp.ne.s32.totalorder %s23, %s24
    %p35 = scmp.eq.s32.totalorder %s15, 0
    %p36 = por %p34, %p35
    %p37 = scmp.ne.s32.totalorder %s23, %s24
    %p38 = scmp.eq.s32.totalorder %s16, 1
    %p39 = por %p37, %p38
    %p41 = scmp.ne.s32.totalorder %s24, %s40
    %p42 = scmp.eq.s32.totalorder %s16, 0
    %p43 = por %p41, %p42
    %s45 = sadd.s32 %s44, 1
    %p48 = scmp.eq.s32.totalorder %s10, 1
    %p49 = scmp.ne.s32.totalorder %s44, %s46
    %p50 = scmp.eq.s32.totalorder %s10, 0
    %p51 = por %p49, %p50
    %p52 = scmp.ne.s32.totalorder %s44, %s46
    %p53 = scmp.eq.s32.totalorder %s15, 1
    %p54 = por %p52, %p53
    %p55 = scmp.ne.s32.totalorder %s46, %s47
    %p56 = scmp.eq.s32.totalorder %s15, 0
    %p57 = por %p55, %p56
    %p58 = scmp.ne.s32.totalorder %s46, %s47
    %p59 = scmp.eq.s32.totalorder %s16, 1
    %p60 = por %p58, %p59
    %p62 = scmp.ne.s32.totalorder %s47, %s61
    %p63 = scmp.eq.s32.totalorder %s16, 0
    %p64 = por %p62, %p63
    %s66 = sadd.s32 %s65, 1
    %p69 = scmp.eq.s32.totalorder %s10, 1
    %p70 = scmp.ne.s32.totalorder %s65, %s67
    %p71 = scmp.eq.s32.totalorder %s10, 0
    %p72 = por %p70, %p71
    %p73 = scmp.ne.s32.totalorder %s65, %s67
    %p74 = scmp.eq.s32.totalorder %s15, 1
    %p75 = por %p73, %p74
    %p76 = scmp.ne.s32.totalorder %s67, %s68
    %p77 = scmp.eq.s32.totalorder %s15, 0
    %p78 = por %p76, %p77
    %p79 = scmp.ne.s32.totalorder %s67, %s68
    %p80 = scmp.eq.s32.totalorder %s16, 1
    %p81 = por %p79, %p80
    %p83 = scmp.ne.s32.totalorder %s68, %s82
    %p84 = scmp.eq.s32.totalorder %s16, 0
    %p85 = por %p83, %p84
    %s86 = ssub.s32 %s10, %s17
    %p87 = scmp.eq.s32.totalorder %s86, 0
    %s89 = sadd.s32 %s88, 1
    %s90 = scalar_select %p87, %s88, %s89
    %p93 = pneg %p87
    %p94 = scmp.eq.s32.totalorder %s10, 1
    %p95 = por %p93, %p94
    %p96 = scmp.ne.s32.totalorder %s88, %s91
    %p97 = scmp.eq.s32.totalorder %s10, 0
    %p98 = por %p96, %p97
    %p99 = scmp.ne.s32.totalorder %s88, %s91
    %p100 = scmp.eq.s32.totalorder %s15, 1
    %p101 = por %p99, %p100
    %p102 = scmp.ne.s32.totalorder %s91, %s92
    %p103 = scmp.eq.s32.totalorder %s15, 0
    %p104 = por %p102, %p103
    %p105 = scmp.ne.s32.totalorder %s91, %s92
    %p106 = scmp.eq.s32.totalorder %s16, 1
    %p107 = por %p105, %p106
    %p109 = scmp.ne.s32.totalorder %s92, %s108
    %p110 = scmp.eq.s32.totalorder %s16, 0
    %p111 = por %p109, %p110
    %s112 = ssub.s32 %s10, %s17
    %p113 = scmp.eq.s32.totalorder %s112, 0
    %s115 = sadd.s32 %s114, 1
    %s116 = scalar_select %p113, %s114, %s115
    %p119 = pneg %p113
    %p120 = scmp.eq.s32.totalorder %s10, 1
    %p121 = por %p119, %p120
    %p122 = scmp.ne.s32.totalorder %s114, %s117
    %p123 = scmp.eq.s32.totalorder %s10, 0
    %p124 = por %p122, %p123
    %p125 = scmp.ne.s32.totalorder %s114, %s117
    %p126 = scmp.eq.s32.totalorder %s15, 1
    %p127 = por %p125, %p126
    %p128 = scmp.ne.s32.totalorder %s117, %s118
    %p129 = scmp.eq.s32.totalorder %s15, 0
    %p130 = por %p128, %p129
    %p131 = scmp.ne.s32.totalorder %s117, %s118
    %p132 = scmp.eq.s32.totalorder %s16, 1
    %p133 = por %p131, %p132
    %p135 = scmp.ne.s32.totalorder %s118, %s134
    %p136 = scmp.eq.s32.totalorder %s16, 0
    %p137 = por %p135, %p136
    %p138 = scmp.le.s32.totalorder 1, %s10
    %p139 = scmp.lt.s32.totalorder %s10, 3
    %p140 = pnand %p138, %p139
    %p141 = pneg %p140
    // Predicated region
    $region9: #{res_block_forward.7} parent=5 // pred_check
      _
    $region10: #{res_block_forward.7} parent=5 // pred_check_branch
      %143 = sbr.rel (%p140) target = $region12
    $region11: #{res_block_forward.7} parent=5 // pred_region
      %s144 = ssub.s32 %s10, 1
      // Predicated region
      $region13: #{res_block_forward.7} parent=11 // pred_check
        %p145 = pneg %p57
      $region14: #{res_block_forward.7} parent=11 // pred_check_branch
        %147 = sbr.rel (%p145) target = $region16
      $region15: #{res_block_forward.7} parent=11 // pred_region
        _
      $region16: #{res_block_forward.7} parent=11 // pred_fallthru
        _
      // Predicated region
      $region17: #{res_block_forward.7} parent=11 // pred_check
        %p148 = pneg %p78
      $region18: #{res_block_forward.7} parent=11 // pred_check_branch
        %150 = sbr.rel (%p148) target = $region20
      $region19: #{res_block_forward.7} parent=11 // pred_region
        _
      $region20: #{res_block_forward.7} parent=11 // pred_fallthru
        _
    $region12: #{res_block_forward.7} parent=5 // pred_fallthru
      _
    %p151 = scmp.lt.s32.totalorder %s10, 2
    // Predicated region
    $region21: #{res_block_forward.7} parent=5 // pred_check
      %p152 = pneg %p151
    $region22: #{res_block_forward.7} parent=5 // pred_check_branch
      %154 = sbr.rel (%p152) target = $region24
    $region23: #{res_block_forward.7} parent=5 // pred_region
      // Predicated region
      $region25: #{res_block_forward.7} parent=23 // pred_check
        %p155 = pneg %p30
      $region26: #{res_block_forward.7} parent=23 // pred_check_branch
        %157 = sbr.rel (%p155) target = $region28
      $region27: #{res_block_forward.7} parent=23 // pred_region
        %s158 = smul.u32 8, %s10
        %p159 = scmp.lt.s32.totalorder %s158, 15
        %s160 = scalar_select %p159, %s158, 15
        %s161 = smul.addr %s160, 8
        %s162 = scalar_lea.vmem %s0, %s161
        %s163 = smul.u32 8, %s10
      $region28: #{res_block_forward.7} parent=23 // pred_fallthru
        _
      // Predicated region
      $region29: #{res_block_forward.7} parent=23 // pred_check
        %p164 = pneg %p98
      $region30: #{res_block_forward.7} parent=23 // pred_check_branch
        %166 = sbr.rel (%p164) target = $region32
      $region31: #{res_block_forward.7} parent=23 // pred_region
        %s167 = smul.u32 8, %s10
        %p168 = scmp.lt.s32.totalorder %s167, 15
        %s169 = scalar_select %p168, %s167, 15
        %s170 = smul.addr %s169, 8
        %s171 = scalar_lea.vmem %s3, %s170
        %s172 = smul.u32 8, %s10
      $region32: #{res_block_forward.7} parent=23 // pred_fallthru
        _
    $region24: #{res_block_forward.7} parent=5 // pred_fallthru
      _
    %p173 = scmp.le.s32.totalorder 1, %s10
    %p174 = scmp.lt.s32.totalorder %s10, 3
    %p175 = pnand %p173, %p174
    %p176 = pneg %p175
    // Predicated region
    $region33: #{res_block_forward.7} parent=5 // pred_check
      _
    $region34: #{res_block_forward.7} parent=5 // pred_check_branch
      %178 = sbr.rel (%p175) target = $region36
    $region35: #{res_block_forward.7} parent=5 // pred_region
      %s179 = ssub.s32 %s10, 1
      %s180 = smul.u32 8, %s15
      %p181 = scmp.lt.s32.totalorder %s180, 15
      %s182 = scalar_select %p181, %s180, 15
      %s183 = smul.addr %s182, 8
      %s184 = scalar_lea.vmem %s0, %s183
      %p185 = pneg %p36
      %p186 = pneg %p33
      %p187 = pneg %p57
      %p188 = pneg %p54
      %p189 = pneg %p78
      %p190 = pneg %p75
      %s191 = smul.u32 8, %s15
      %p192 = scmp.lt.s32.totalorder %s191, 15
      %s193 = scalar_select %p192, %s191, 15
      %s194 = smul.addr %s193, 8
      %s195 = scalar_lea.vmem %s3, %s194
      %p196 = pneg %p104
      %p197 = pneg %p101
      %p198 = pneg %p130
      %p199 = pneg %p127
      %s200 = smul.u32 8, %s15
      %p201 = scmp.lt.s32.totalorder %s200, 15
      %s202 = scalar_select %p201, %s200, 15
      %s203 = smul.addr %s202, 8
      %s204 = scalar_lea.vmem %s4, %s203
      %s205 = smul.u32 8, %s15
      %p206 = scmp.lt.s32.totalorder %s205, 15
      %s207 = scalar_select %p206, %s205, 15
      %s208 = smul.addr %s207, 8
      %s209 = scalar_lea.vmem %s0, %s208
      %s210 = smul.u32 8, %s15
      %s211 = smul.u32 8, %s15
      %p212 = scmp.lt.s32.totalorder %s211, 15
      %s213 = scalar_select %p212, %s211, 15
      %s214 = smul.addr %s213, 8
      %s215 = scalar_lea.vmem %s3, %s214
      %s216 = smul.u32 8, %s15
      %s217 = smul.u32 8, %s15
      %p218 = scmp.lt.s32.totalorder %s217, 15
      %s219 = scalar_select %p218, %s217, 15
      %s220 = smul.addr %s219, 8
      %s221 = scalar_lea.vmem %s4, %s220
      %s222 = smul.u32 8, %s15
      %v223 = vld [vmem:[%s209] sm:$0xff]
      %v224 = vld [vmem:[%s209 + $0x8] sm:$0xff]
      %v225 = vld [vmem:[%s209 + $0x10] sm:$0xff]
      %v226 = vld [vmem:[%s209 + $0x18] sm:$0xff]
      %v227 = vld [vmem:[%s209 + $0x20] sm:$0xff]
      %v228 = vld [vmem:[%s209 + $0x28] sm:$0xff]
      %v229 = vld [vmem:[%s209 + $0x30] sm:$0xff]
      %v230 = vld [vmem:[%s209 + $0x38] sm:$0xff]
      %v231 = vld [vmem:[%s1] sm:$0x1]
      %v233 = vperm.slane %v231, 0
      %v235 = vmul.f32 %v223, %v233
      %v236 = vmul.f32 %v224, %v233
      %v237 = vmul.f32 %v225, %v233
      %v238 = vmul.f32 %v226, %v233
      %v239 = vmul.f32 %v227, %v233
      %v240 = vmul.f32 %v228, %v233
      %v241 = vmul.f32 %v229, %v233
      %v242 = vmul.f32 %v230, %v233
      %v243 = vld [vmem:[%s2] sm:$0x1]
      %v245 = vperm.slane %v243, 0
      %v247 = vadd.f32 %v235, %v245
      %v248 = vadd.f32 %v236, %v245
      %v249 = vadd.f32 %v237, %v245
      %v250 = vadd.f32 %v238, %v245
      %v251 = vadd.f32 %v239, %v245
      %v252 = vadd.f32 %v240, %v245
      %v253 = vadd.f32 %v241, %v245
      %v254 = vadd.f32 %v242, %v245
      %v255 = vld [vmem:[%s215] sm:$0xff]
      %v256 = vld [vmem:[%s215 + $0x8] sm:$0xff]
      %v257 = vld [vmem:[%s215 + $0x10] sm:$0xff]
      %v258 = vld [vmem:[%s215 + $0x18] sm:$0xff]
      %v259 = vld [vmem:[%s215 + $0x20] sm:$0xff]
      %v260 = vld [vmem:[%s215 + $0x28] sm:$0xff]
      %v261 = vld [vmem:[%s215 + $0x30] sm:$0xff]
      %v262 = vld [vmem:[%s215 + $0x38] sm:$0xff]
      %v263 = vadd.f32 %v255, %v247
      %v264 = vadd.f32 %v256, %v248
      %v265 = vadd.f32 %v257, %v249
      %v266 = vadd.f32 %v258, %v250
      %v267 = vadd.f32 %v259, %v251
      %v268 = vadd.f32 %v260, %v252
      %v269 = vadd.f32 %v261, %v253
      %v270 = vadd.f32 %v262, %v254
      %v271 = vmax.f32 %v263, 0.0
      %v272 = vmax.f32 %v264, 0.0
      %v273 = vmax.f32 %v265, 0.0
      %v274 = vmax.f32 %v266, 0.0
      %v275 = vmax.f32 %v267, 0.0
      %v276 = vmax.f32 %v268, 0.0
      %v277 = vmax.f32 %v269, 0.0
      %v278 = vmax.f32 %v270, 0.0
      %vm279 = vcmask 64512
      %280 = vst.msk [vmem:[%s221] sm:$0xff] %vm279, %v271
      %281 = vst.msk [vmem:[%s221 + $0x8] sm:$0xff] %vm279, %v272
      %282 = vst.msk [vmem:[%s221 + $0x10] sm:$0xff] %vm279, %v273
      %283 = vst.msk [vmem:[%s221 + $0x18] sm:$0xff] %vm279, %v274
      %284 = vst.msk [vmem:[%s221 + $0x20] sm:$0xff] %vm279, %v275
      %285 = vst.msk [vmem:[%s221 + $0x28] sm:$0xff] %vm279, %v276
      %286 = vst.msk [vmem:[%s221 + $0x30] sm:$0xff] %vm279, %v277
      %287 = vst.msk [vmem:[%s221 + $0x38] sm:$0xff] %vm279, %v278
      %s288 = smul.u32 8, %s15
      %p289 = scmp.lt.s32.totalorder %s288, 15
      %s290 = scalar_select %p289, %s288, 15
      %s291 = smul.addr %s290, 8
      %s292 = scalar_lea.vmem %s4, %s291
      // Predicated region
      $region37: #{res_block_forward.7} parent=35 // pred_check
        %p293 = pneg %p127
      $region38: #{res_block_forward.7} parent=35 // pred_check_branch
        %295 = sbr.rel (%p293) target = $region40
      $region39: #{res_block_forward.7} parent=35 // pred_region
        %s296 = smul.u32 8, %s15
      $region40: #{res_block_forward.7} parent=35 // pred_fallthru
        _
    $region36: #{res_block_forward.7} parent=5 // pred_fallthru
      _
    %p297 = scmp.le.s32.totalorder 2, %s10
    // Predicated region
    $region41: #{res_block_forward.7} parent=5 // pred_check
      %p298 = pneg %p297
    $region42: #{res_block_forward.7} parent=5 // pred_check_branch
      %300 = sbr.rel (%p298) target = $region44
    $region43: #{res_block_forward.7} parent=5 // pred_region
      %s301 = ssub.s32 %s10, 2
      // Predicated region
      $region45: #{res_block_forward.7} parent=43 // pred_check
        %p302 = pneg %p133
      $region46: #{res_block_forward.7} parent=43 // pred_check_branch
        %304 = sbr.rel (%p302) target = $region48
      $region47: #{res_block_forward.7} parent=43 // pred_region
        %s305 = smul.u32 8, %s16
        %p306 = scmp.lt.s32.totalorder %s305, 15
        %s307 = scalar_select %p306, %s305, 15
        %s308 = smul.addr %s307, 8
        %s309 = scalar_lea.vmem %s4, %s308
      $region48: #{res_block_forward.7} parent=43 // pred_fallthru
        _
    $region44: #{res_block_forward.7} parent=5 // pred_fallthru
      _
  $region6: #{res_block_forward.7} parent=0 // loop_footer
    %s14 = sadd.s32 1, %s10
  $region7: #{res_block_forward.7} parent=0 // loop_footer_branch
    %9 = sbr.rel target = $region3
  $region8: #{res_block_forward.7} parent=0 // loop_exit
    _

</llo_original>
